<compile_context>
chip_gen: v7x
topology: tpu7x:2x2x1
jax: 0.10.0
libtpu: 0.0.40
codegen_flags: <defaults>
</compile_context>

<pallas_src>
import functools
from dataclasses import dataclass

import jax
import jax.numpy as jnp
from jax.experimental import pallas as pl
from jax.experimental.pallas import tpu as pltpu

PAD_ID = 1
QA_PAD = 128          # lane-dense width for the QA output (cols 0/1 = start/end)
STEPS_PAD = 128       # lane-dense width for the step-counter output
LOGIT_PAD = 128       # lane-dense width for the per-step chain logits output


@dataclass(frozen=True)   # frozen -> hashable -> usable as a static jit argument
class Config:
    hidden_size: int = 32
    vocab_size: int = 100
    context_aware_qa: bool = True
    mask_context_embedding: bool = False
    num_chains: int = 3
    dev_num_chains: int = 3
    teacher_forcing: bool = False


def _round_up(x, m):
    return ((x + m - 1) // m) * m


def _row_tile(M, block_rows):
    # aim for >=2 "parallel" row tiles when M allows so both v7x TensorCores get work
    tm = min(block_rows, _round_up(M, 8))
    if M >= 16:
        tm = min(tm, _round_up(pl.cdiv(M, 2), 8))
    return tm


# --------------------------------------------------------------------------
# second encoder pass fused with the QA head:
#   seq = tanh(x @ Wenc + benc)
#   qa  = seq @ Wqa_seq + ctx @ Wqa_ctx + bqa        (concat never materialized)
# QA weights are pre-padded to 128 output lanes -> lane-dense stores.
# TODO(synk): at RoBERTa-scale hidden dims, cast MXU operands to bf16 (f32 accumulate)
# and tile K / set vmem_limit_bytes explicitly (v5e 16 MiB scoped default).
# --------------------------------------------------------------------------
def _qa_head_kernel(x_ref, ew_ref, eb_ref, ctx_ref, ws_ref, wc_ref, bq_ref, o_ref,
                    *, use_ctx):
    seq = jnp.tanh(
        jnp.dot(x_ref[...], ew_ref[...], preferred_element_type=jnp.float32) + eb_ref[...])
    y = jnp.dot(seq, ws_ref[...], preferred_element_type=jnp.float32) + bq_ref[...]
    if use_ctx:
        y = y + jnp.dot(ctx_ref[...], wc_ref[...], preferred_element_type=jnp.float32)
    o_ref[...] = y


def qa_head(x, ctx, params, *, use_ctx, block_rows=256):
    M, H = x.shape
    qp = params["wqa_seq"].shape[1]
    tm = _row_tile(M, block_rows)
    mp = _round_up(M, tm)
    if mp != M:
        x = jnp.pad(x, ((0, mp - M), (0, 0)))
        ctx = jnp.pad(ctx, ((0, mp - M), (0, 0)))
    out = pl.pallas_call(
        functools.partial(_qa_head_kernel, use_ctx=use_ctx),
        out_shape=jax.ShapeDtypeStruct((mp, qp), jnp.float32),
        grid=(mp // tm,),
        in_specs=[pl.BlockSpec((tm, H), lambda i: (i, 0)),
                  pl.BlockSpec((H, H), lambda i: (0, 0)),
                  pl.BlockSpec((1, H), lambda i: (0, 0)),
                  pl.BlockSpec((tm, H), lambda i: (i, 0)),
                  pl.BlockSpec((H, qp), lambda i: (0, 0)),
                  pl.BlockSpec((H, qp), lambda i: (0, 0)),
                  pl.BlockSpec((1, qp), lambda i: (0, 0))],
        out_specs=pl.BlockSpec((tm, qp), lambda i: (i, 0)),
        compiler_params=pltpu.CompilerParams(dimension_semantics=("parallel",)),
    )(x, params["enc_w"], params["enc_b"], ctx,
      params["wqa_seq"], params["wqa_ctx"], params["bqa"])
    return out[:M] if mp != M else out


# --------------------------------------------------------------------------
# fused kernel: first encoder pass (stub) + sentence aggregation + the whole
# sequential selection chain.  grid = (num_chains,), "arbitrary".
# All chain state lives in VMEM scratch; all HBM outputs have constant block
# indices -> a single writeback at the end of the grid.
# --------------------------------------------------------------------------
def _chain_kernel(ind_ref, indp_ref, emb_ref, eoc_ref, ew_ref, eb_ref,
                  w1_ref, b1_ref, w2r_ref, b2_ref,
                  logits_ref, attn_ref, steps_ref, ctx_ref,
                  sent_sc, slen_sc, cur_sc, clen_sc, mask_sc, osum_sc, done_sc, cnt_sc,
                  *, n_sent):
    step = pl.program_id(0)
    B, S, H = emb_ref.shape
    N = n_sent + 1                    # content sentences + EOC slot
    NP = logits_ref.shape[-1]         # lane-padded logits width (128)

    # ---- step 0: fused first-encoder pass + masked segment sums into VMEM scratch ----
    @pl.when(step == 0)
    def _init():
        emb = emb_ref[...]                                        # (B, S, H) f32
        hid = jnp.tanh(
            jnp.dot(emb.reshape(B * S, H), ew_ref[...],
                    preferred_element_type=jnp.float32) + eb_ref[...]
        ).reshape(B, S, H)
        ctx_ref[...] = hid                                        # context_embedding out

        ind = ind_ref[...]                                        # (B, S) int32
        # question = sentence id 0
        qmask = (ind == 0).astype(jnp.float32)
        cur_sc[...] = jnp.sum(hid * qmask[:, :, None], axis=1)    # (B, H)
        clen_sc[...] = jnp.sum(qmask, axis=1, keepdims=True)      # (B, 1)
        # row j holds sentence id j+1 (j < n_sent); row n_sent is the EOC vector
        row = jax.lax.broadcasted_iota(jnp.int32, (B, N, S), 1)
        cmask = jnp.where(row < n_sent,
                          (ind[:, None, :] == row + 1).astype(jnp.float32), 0.0)
        sums = jnp.einsum("bns,bsh->bnh", cmask, hid,
                          preferred_element_type=jnp.float32)     # (B, N, H)
        lens = jnp.sum(cmask, axis=-1)                            # (B, N)
        is_eoc = (jax.lax.broadcasted_iota(jnp.int32, (B, N), 1)
                  == n_sent).astype(jnp.float32)                  # (B, N)
        sent_sc[...] = sums + is_eoc[:, :, None] * eoc_ref[...][None, :, :]
        slen_sc[...] = lens + is_eoc                              # EOC length = 1
        mask_sc[...] = jnp.ones((B, N), jnp.float32)
        osum_sc[...] = jnp.zeros((B, N), jnp.float32)
        done_sc[...] = jnp.zeros((1, 1), jnp.float32)
        cnt_sc[...] = jnp.zeros((1, 1), jnp.float32)
        logits_ref[...] = jnp.zeros_like(logits_ref)              # steps past the break stay 0

    # ---- one selection step; real skip once batch 0 has picked EOC (python `break`) ----
    @pl.when(done_sc[0, 0] < 0.5)
    def _select():
        sents = sent_sc[...]                      # (B, N, H)
        slens = slen_sc[...]                      # (B, N)
        cur = cur_sc[...]                         # (B, H)
        clen = clen_sc[...]                       # (B, 1)
        selmask = mask_sc[...]                    # (B, N)

        comb = cur[:, None, :] + sents            # (B, N, H)
        comb_len = clen + slens                   # (B, N)
        # NOTE: like the torch module this misbehaves if a sentence id has no tokens
        # (reciprocal of 0); lengths are small positive integers in valid inputs.
        inv_len = pl.reciprocal(comb_len, approx=True)            # EUP slot
        pooled = comb * inv_len[:, :, None]

        # sentence_classifier: Linear(H, H//2) -> ReLU -> Linear(H//2, 1)
        x = pooled.reshape(B * N, H)
        h = jnp.maximum(
            jnp.dot(x, w1_ref[...], preferred_element_type=jnp.float32) + b1_ref[...], 0.0)
        # H/2 -> 1 projection on the VPU (multiply + lane reduce), keeps the MXU free
        lg = jnp.sum(h * w2r_ref[...], axis=-1, keepdims=True) + b2_ref[...]
        logits = lg.reshape(B, N)
        masked = jnp.where(selmask > 0.0, logits, -1e9)           # util.mask_tensor

        # argmax -> one-hot (eval path), first occurrence on ties like torch.argmax
        col = jax.lax.broadcasted_iota(jnp.int32, (B, N), 1)
        maxv = jnp.max(masked, axis=-1, keepdims=True)
        idx = jnp.min(jnp.where(masked >= maxv, col, N), axis=-1, keepdims=True)
        onehot = (col == idx).astype(jnp.float32)

        # batch-0 EOC gate (exactly the torch `if one_hot[0][-1] ...` semantics)
        eoc_sel = onehot[0:1, N - 1:N]                            # (1, 1)
        mask_sc[...] = jnp.where(eoc_sel > 0.0, selmask, (1.0 - onehot) * selmask)
        cur_sc[...] = jnp.sum(onehot[:, :, None] * comb, axis=1)            # (B, H)
        clen_sc[...] = jnp.sum(onehot * comb_len, axis=1, keepdims=True)    # (B, 1)
        osum_sc[...] = osum_sc[...] + onehot
        cnt_sc[...] = cnt_sc[...] + 1.0
        done_sc[...] = done_sc[...] + eoc_sel

        # per-step chain logits, lane-padded to 128, written into the RESIDENT output
        # block (constant out-index) -> single lane-dense HBM writeback at grid end.
        colp = jax.lax.broadcasted_iota(jnp.int32, (B, NP), 1)
        padded = jnp.zeros((B, NP), jnp.float32)
        for j in range(N):
            padded = jnp.where(colp == j, masked[:, j:j + 1], padded)
        logits_ref[step] = padded

    # ---- util.convert + step counter: only on the final grid step ----
    @pl.when(step == pl.num_programs(0) - 1)
    def _finalize():
        # token mask = question tokens | tokens of selected sentences, computed on the
        # 128-lane padded indicator (pad value -1 never matches) -> lane-dense store.
        osum_clip = jnp.minimum(osum_sc[...], 1.0)
        indp = indp_ref[...]                                      # (B, SP) int32
        acc = (indp == 0).astype(jnp.float32)
        for j in range(N):
            acc = acc + osum_clip[:, j:j + 1] * (indp == (j + 1)).astype(jnp.float32)
        attn_ref[...] = (acc > 0.5).astype(jnp.float32)
        steps_ref[...] = jnp.broadcast_to(cnt_sc[...], steps_ref.shape)


def selection_chain(emb, sentence_indicator, params, *, n_sent, num_chains):
    B, S, H = emb.shape
    N = n_sent + 1
    SP = _round_up(max(S, 128), 128)
    H2 = params["w1"].shape[1]

    ind = sentence_indicator                                     # (B, S) int32
    ind_pad = jnp.pad(ind, ((0, 0), (0, SP - S)), constant_values=-1)

    # All chain inputs are grid-invariant (constant index maps).
    # TODO(synk): at RoBERTa scale pass pipeline_mode=pl.Buffered(1) (or a manual step-0
    # DMA from pl.ANY) so the (B,S,H) slab and weights are single-buffered on v7x's
    # 64 MiB VMEM.
    def _const(shape):
        nd = len(shape)
        return pl.BlockSpec(shape, lambda i, _nd=nd: (0,) * _nd)

    out_shape = (
        jax.ShapeDtypeStruct((num_chains, B, LOGIT_PAD), jnp.float32),  # per-step logits
        jax.ShapeDtypeStruct((B, SP), jnp.float32),              # token attention mask
        jax.ShapeDtypeStruct((1, STEPS_PAD), jnp.float32),       # executed-step counter
        jax.ShapeDtypeStruct((B, S, H), jnp.float32),            # context_embedding
    )
    out_specs = (
        pl.BlockSpec((num_chains, B, LOGIT_PAD), lambda i: (0, 0, 0)),
        pl.BlockSpec((B, SP), lambda i: (0, 0)),
        pl.BlockSpec((1, STEPS_PAD), lambda i: (0, 0)),
        pl.BlockSpec((B, S, H), lambda i: (0, 0, 0)),
    )

    return pl.pallas_call(
        functools.partial(_chain_kernel, n_sent=n_sent),
        out_shape=out_shape,
        grid=(num_chains,),
        in_specs=[_const((B, S)), _const((B, SP)), _const((B, S, H)), _const((1, H)),
                  _const((H, H)), _const((1, H)),
                  _const((H, H2)), _const((1, H2)), _const((1, H2)), _const((1, 1))],
        out_specs=out_specs,
        scratch_shapes=[
            pltpu.VMEM((B, N, H), jnp.float32),   # sentence sums (incl. EOC row)
            pltpu.VMEM((B, N), jnp.float32),      # sentence lengths
            pltpu.VMEM((B, H), jnp.float32),      # cur_embedding
            pltpu.VMEM((B, 1), jnp.float32),      # cur_emb_len
            pltpu.VMEM((B, N), jnp.float32),      # selected_sentence_mask
            pltpu.VMEM((B, N), jnp.float32),      # selected_sentences_one_hot (sum)
            pltpu.VMEM((1, 1), jnp.float32),      # done flag (batch-0 EOC) -> pl.when skip
            pltpu.VMEM((1, 1), jnp.float32),      # executed-step counter
        ],
        compiler_params=pltpu.CompilerParams(dimension_semantics=("arbitrary",)),
    )(ind, ind_pad, emb, params["eoc"], params["enc_w"], params["enc_b"],
      params["w1"], params["b1"], params["w2r"], params["b2"])


# --------------------------------------------------------------------------
# full forward (eval path: argmax selection, dev_num_chains)
# --------------------------------------------------------------------------
@functools.partial(jax.jit, static_argnames=("num_sentences", "config"))
def _forward_core(params, input_ids, attention_mask_in, sentence_indicator,
                  num_sentences, config):
    B, S = input_ids.shape
    H = config.hidden_size
    N = num_sentences + 1

    # ---- first encoder pass (fused into the chain kernel) ----
    # TODO(synk): RobertaModel.from_pretrained has no in-script equivalent; replaced
    # by a deterministic embedding lookup + one linear+tanh layer inside the kernel.
    attn_in = attention_mask_in.astype(jnp.float32)
    emb = jnp.take(params["emb"], input_ids, axis=0) * attn_in[..., None]

    # ---- fused encoder + sentence aggregation + sequential selection chain ----
    chain_pad, attn_pad, steps, context_embedding = selection_chain(
        emb, sentence_indicator, params,
        n_sent=num_sentences, num_chains=config.dev_num_chains)
    chain_logits = chain_pad[:, :, :N]

    attn_f = attn_pad[:, :S]                             # (B, S) float {0, 1}
    attention_mask = attn_f.astype(jnp.int32)
    new_ids = input_ids * attention_mask + (1 - attention_mask) * PAD_ID

    # ---- second encoder pass fused with the QA head ----
    emb2 = jnp.take(params["emb"], new_ids, axis=0) * attn_f[..., None]
    ctx = context_embedding
    if config.mask_context_embedding:
        ctx = attn_f[..., None] * ctx
    use_ctx = config.context_aware_qa or config.mask_context_embedding
    qa = qa_head(emb2.reshape(B * S, H), ctx.reshape(B * S, H), params, use_ctx=use_ctx)
    start_logits = qa[:, 0].reshape(B, S)
    end_logits = qa[:, 1].reshape(B, S)
    return start_logits, end_logits, chain_logits, steps


def forward(params, features, sentence_indicator, config, num_sentences):
    start_logits, end_logits, chain_arr, steps = _forward_core(
        params, features["input_ids"], features["attention_mask"], sentence_indicator,
        num_sentences=num_sentences, config=config)
    # Single device->host read at the very end (all compute already enqueued) to
    # reproduce the data-dependent `break` / variable-length chain_logits list.
    n_steps = max(1, min(int(steps[0, 0]), config.dev_num_chains))
    chain_logits = [chain_arr[i] for i in range(n_steps)]
    return start_logits, end_logits, chain_logits


# --------------------------------------------------------------------------
# deterministic parameter init (shapes follow the module's __init__; biases are
# stored 2-D and the QA weights are split/padded once for kernel consumption)
# --------------------------------------------------------------------------
def init_params(key, config):
    H = config.hidden_size
    H2 = H // 2
    use_ctx = config.context_aware_qa or config.mask_context_embedding
    qa_in = 2 * H if use_ctx else H
    ks = jax.random.split(key, 6)

    def xavier(k, shape):
        lim = (6.0 / (shape[0] + shape[1])) ** 0.5
        return jax.random.uniform(k, shape, jnp.float32, -lim, lim)

    wqa = xavier(ks[4], (qa_in, 2))                      # qa_output Linear(qa_in, 2)
    wqa_seq = jnp.zeros((H, QA_PAD), jnp.float32).at[:, :2].set(wqa[:H])
    wqa_ctx = jnp.zeros((H, QA_PAD), jnp.float32)
    if use_ctx:
        wqa_ctx = wqa_ctx.at[:, :2].set(wqa[H:])

    return {
        "emb": jax.random.normal(ks[0], (config.vocab_size, H), jnp.float32) * 0.02,
        "enc_w": xavier(ks[1], (H, H)),
        "enc_b": jnp.zeros((1, H), jnp.float32),
        "w1": xavier(ks[2], (H, H2)),                    # sentence_classifier L1
        "b1": jnp.zeros((1, H2), jnp.float32),
        "w2r": xavier(ks[3], (1, H2)),                   # sentence_classifier L2 (row form)
        "b2": jnp.zeros((1, 1), jnp.float32),
        "wqa_seq": wqa_seq,                              # qa_output, padded to 128 lanes
        "wqa_ctx": wqa_ctx,
        "bqa": jnp.zeros((1, QA_PAD), jnp.float32),
        "eoc": xavier(ks[5], (1, H)),                    # eoc_vector (xavier_uniform)
    }


if __name__ == "__main__":
    # TODO(synk): training path (gumbel-softmax / teacher forcing) not implemented;
    # this reproduces the eval (argmax, dev_num_chains) forward path.
    config = Config()
    key = jax.random.PRNGKey(0)
    pkey, dkey = jax.random.split(key)
    params = init_params(pkey, config)

    B, S = 2, 16
    input_ids = jax.random.randint(dkey, (B, S), 2, config.vocab_size, dtype=jnp.int32)
    attention_mask = jnp.ones((B, S), jnp.int32)
    features = {"input_ids": input_ids, "attention_mask": attention_mask}
    # tokens 0-3: question (id 0); 4-7: sentence 1; 8-11: sentence 2;
    # 12-14: sentence 3; 15: trailing special token (id 4)
    indicator_row = [0, 0, 0, 0, 1, 1, 1, 1, 2, 2, 2, 2, 3, 3, 3, 4]
    sentence_indicator = jnp.array([indicator_row] * B, dtype=jnp.int32)
    # Number of content sentences is static (taken once from the host-side spec,
    # not read back from device data — avoids a per-call host sync).
    num_sentences = indicator_row[-2]                    # = 3

    start_logits, end_logits, chain_logits = forward(
        params, features, sentence_indicator, config, num_sentences)
    jax.block_until_ready((start_logits, end_logits, chain_logits))

    N = num_sentences + 1
    assert start_logits.shape == (B, S) and end_logits.shape == (B, S)
    assert 1 <= len(chain_logits) <= config.dev_num_chains
    assert all(cl.shape == (B, N) for cl in chain_logits)
    print("KERNEL_OK")
</pallas_src>

<mosaic_0001>
module attributes {stable_mosaic.version = 11 : i64} {
  func.func @_qa_head_kernel(%arg0: i32, %arg1: memref<16x32xf32, #tpu.memory_space<vmem>>, %arg2: memref<32x32xf32, #tpu.memory_space<vmem>>, %arg3: memref<1x32xf32, #tpu.memory_space<vmem>>, %arg4: memref<16x32xf32, #tpu.memory_space<vmem>>, %arg5: memref<32x128xf32, #tpu.memory_space<vmem>>, %arg6: memref<32x128xf32, #tpu.memory_space<vmem>>, %arg7: memref<1x128xf32, #tpu.memory_space<vmem>>, %arg8: memref<16x128xf32, #tpu.memory_space<vmem>>) attributes {dimension_semantics = [#tpu.dimension_semantics<parallel>], iteration_bounds = array<i64: 2>, scalar_prefetch = 0 : i64, scratch_operands = 0 : i64, tpu.core_type = #tpu.core_type<tc>, window_params = [{transform_indices = @transform_0, window_bounds = array<i64: 16, 32>}, {pipeline_mode = #tpu.pipeline_mode<synchronous>, transform_indices = @transform_1, window_bounds = array<i64: 32, 32>}, {pipeline_mode = #tpu.pipeline_mode<synchronous>, transform_indices = @transform_2, window_bounds = array<i64: 1, 32>}, {transform_indices = @transform_3, window_bounds = array<i64: 16, 32>}, {pipeline_mode = #tpu.pipeline_mode<synchronous>, transform_indices = @transform_4, window_bounds = array<i64: 32, 128>}, {pipeline_mode = #tpu.pipeline_mode<synchronous>, transform_indices = @transform_5, window_bounds = array<i64: 32, 128>}, {pipeline_mode = #tpu.pipeline_mode<synchronous>, transform_indices = @transform_6, window_bounds = array<i64: 1, 128>}, {transform_indices = @transform_7, window_bounds = array<i64: 16, 128>}]} {
    %c0 = arith.constant 0 : index
    %c0_0 = arith.constant 0 : index
    %0 = vector.load %arg1[%c0, %c0_0] : memref<16x32xf32, #tpu.memory_space<vmem>>, vector<16x32xf32>
    %c0_1 = arith.constant 0 : index
    %c0_2 = arith.constant 0 : index
    %1 = vector.load %arg2[%c0_1, %c0_2] : memref<32x32xf32, #tpu.memory_space<vmem>>, vector<32x32xf32>
    %cst = arith.constant dense<0.000000e+00> : vector<16x32xf32>
    %2 = tpu.matmul %0, %1, %cst {dimension_numbers = #tpu.dot_dimension_numbers<[1], [0], [0], [1], [0, 0, 1, 1], [], []>} : vector<16x32xf32>, vector<32x32xf32>, vector<16x32xf32> -> vector<16x32xf32>
    %c0_3 = arith.constant 0 : index
    %c0_4 = arith.constant 0 : index
    %3 = vector.load %arg3[%c0_3, %c0_4] : memref<1x32xf32, #tpu.memory_space<vmem>>, vector<1x32xf32>
    %4 = vector.broadcast %3 : vector<1x32xf32> to vector<16x32xf32>
    %5 = arith.addf %2, %4 : vector<16x32xf32>
    %6 = math.tanh %5 : vector<16x32xf32>
    %c0_5 = arith.constant 0 : index
    %c0_6 = arith.constant 0 : index
    %7 = vector.load %arg5[%c0_5, %c0_6] : memref<32x128xf32, #tpu.memory_space<vmem>>, vector<32x128xf32>
    %cst_7 = arith.constant dense<0.000000e+00> : vector<16x128xf32>
    %8 = tpu.matmul %6, %7, %cst_7 {dimension_numbers = #tpu.dot_dimension_numbers<[1], [0], [0], [1], [0, 0, 1, 1], [], []>} : vector<16x32xf32>, vector<32x128xf32>, vector<16x128xf32> -> vector<16x128xf32>
    %c0_8 = arith.constant 0 : index
    %c0_9 = arith.constant 0 : index
    %9 = vector.load %arg7[%c0_8, %c0_9] : memref<1x128xf32, #tpu.memory_space<vmem>>, vector<1x128xf32>
    %10 = vector.broadcast %9 : vector<1x128xf32> to vector<16x128xf32>
    %11 = arith.addf %8, %10 : vector<16x128xf32>
    %c0_10 = arith.constant 0 : index
    %c0_11 = arith.constant 0 : index
    %12 = vector.load %arg4[%c0_10, %c0_11] : memref<16x32xf32, #tpu.memory_space<vmem>>, vector<16x32xf32>
    %c0_12 = arith.constant 0 : index
    %c0_13 = arith.constant 0 : index
    %13 = vector.load %arg6[%c0_12, %c0_13] : memref<32x128xf32, #tpu.memory_space<vmem>>, vector<32x128xf32>
    %cst_14 = arith.constant dense<0.000000e+00> : vector<16x128xf32>
    %14 = tpu.matmul %12, %13, %cst_14 {dimension_numbers = #tpu.dot_dimension_numbers<[1], [0], [0], [1], [0, 0, 1, 1], [], []>} : vector<16x32xf32>, vector<32x128xf32>, vector<16x128xf32> -> vector<16x128xf32>
    %15 = arith.addf %11, %14 : vector<16x128xf32>
    %c0_15 = arith.constant 0 : index
    %c0_16 = arith.constant 0 : index
    %16 = vector.load %arg8[%c0_15, %c0_16] : memref<16x128xf32, #tpu.memory_space<vmem>>, vector<16x128xf32>
    tpu.vector_store %arg8[%c0_15, %c0_16], %15 {strides = array<i32>} : memref<16x128xf32, #tpu.memory_space<vmem>>, vector<16x128xf32>,
    return
  }
  func.func @transform_0(%arg0: i32) -> (i32, i32) {
    %c0_i32 = arith.constant 0 : i32
    %c0_i32_0 = arith.constant 0 : i32
    return %arg0, %c0_i32 : i32, i32
  }
  func.func @transform_1(%arg0: i32) -> (i32, i32) {
    %c0_i32 = arith.constant 0 : i32
    %c0_i32_0 = arith.constant 0 : i32
    %c0_i32_1 = arith.constant 0 : i32
    return %c0_i32, %c0_i32_0 : i32, i32
  }
  func.func @transform_2(%arg0: i32) -> (i32, i32) {
    %c0_i32 = arith.constant 0 : i32
    %c0_i32_0 = arith.constant 0 : i32
    %c0_i32_1 = arith.constant 0 : i32
    return %c0_i32, %c0_i32_0 : i32, i32
  }
  func.func @transform_3(%arg0: i32) -> (i32, i32) {
    %c0_i32 = arith.constant 0 : i32
    %c0_i32_0 = arith.constant 0 : i32
    return %arg0, %c0_i32 : i32, i32
  }
  func.func @transform_4(%arg0: i32) -> (i32, i32) {
    %c0_i32 = arith.constant 0 : i32
    %c0_i32_0 = arith.constant 0 : i32
    %c0_i32_1 = arith.constant 0 : i32
    return %c0_i32, %c0_i32_0 : i32, i32
  }
  func.func @transform_5(%arg0: i32) -> (i32, i32) {
    %c0_i32 = arith.constant 0 : i32
    %c0_i32_0 = arith.constant 0 : i32
    %c0_i32_1 = arith.constant 0 : i32
    return %c0_i32, %c0_i32_0 : i32, i32
  }
  func.func @transform_6(%arg0: i32) -> (i32, i32) {
    %c0_i32 = arith.constant 0 : i32
    %c0_i32_0 = arith.constant 0 : i32
    %c0_i32_1 = arith.constant 0 : i32
    return %c0_i32, %c0_i32_0 : i32, i32
  }
  func.func @transform_7(%arg0: i32) -> (i32, i32) {
    %c0_i32 = arith.constant 0 : i32
    %c0_i32_0 = arith.constant 0 : i32
    return %arg0, %c0_i32 : i32, i32
  }
}

module attributes {stable_mosaic.version = 11 : i64} {
  func.func @_chain_kernel(%arg0: i32, %arg1: memref<2x16xi32, #tpu.memory_space<vmem>>, %arg2: memref<2x128xi32, #tpu.memory_space<vmem>>, %arg3: memref<2x16x32xf32, #tpu.memory_space<vmem>>, %arg4: memref<1x32xf32, #tpu.memory_space<vmem>>, %arg5: memref<32x32xf32, #tpu.memory_space<vmem>>, %arg6: memref<1x32xf32, #tpu.memory_space<vmem>>, %arg7: memref<32x16xf32, #tpu.memory_space<vmem>>, %arg8: memref<1x16xf32, #tpu.memory_space<vmem>>, %arg9: memref<1x16xf32, #tpu.memory_space<vmem>>, %arg10: memref<1x1xf32, #tpu.memory_space<vmem>>, %arg11: memref<3x2x128xf32, #tpu.memory_space<vmem>>, %arg12: memref<2x128xf32, #tpu.memory_space<vmem>>, %arg13: memref<1x128xf32, #tpu.memory_space<vmem>>, %arg14: memref<2x16x32xf32, #tpu.memory_space<vmem>>, %arg15: memref<2x4x32xf32, #tpu.memory_space<vmem>>, %arg16: memref<2x4xf32, #tpu.memory_space<vmem>>, %arg17: memref<2x32xf32, #tpu.memory_space<vmem>>, %arg18: memref<2x1xf32, #tpu.memory_space<vmem>>, %arg19: memref<2x4xf32, #tpu.memory_space<vmem>>, %arg20: memref<2x4xf32, #tpu.memory_space<vmem>>, %arg21: memref<1x1xf32, #tpu.memory_space<vmem>>, %arg22: memref<1x1xf32, #tpu.memory_space<vmem>>) attributes {dimension_semantics = [#tpu.dimension_semantics<arbitrary>], iteration_bounds = array<i64: 3>, scalar_prefetch = 0 : i64, scratch_operands = 8 : i64, tpu.core_type = #tpu.core_type<tc>, window_params = [{pipeline_mode = #tpu.pipeline_mode<synchronous>, transform_indices = @transform_0, window_bounds = array<i64: 2, 16>}, {pipeline_mode = #tpu.pipeline_mode<synchronous>, transform_indices = @transform_1, window_bounds = array<i64: 2, 128>}, {pipeline_mode = #tpu.pipeline_mode<synchronous>, transform_indices = @transform_2, window_bounds = array<i64: 2, 16, 32>}, {pipeline_mode = #tpu.pipeline_mode<synchronous>, transform_indices = @transform_3, window_bounds = array<i64: 1, 32>}, {pipeline_mode = #tpu.pipeline_mode<synchronous>, transform_indices = @transform_4, window_bounds = array<i64: 32, 32>}, {pipeline_mode = #tpu.pipeline_mode<synchronous>, transform_indices = @transform_5, window_bounds = array<i64: 1, 32>}, {pipeline_mode = #tpu.pipeline_mode<synchronous>, transform_indices = @transform_6, window_bounds = array<i64: 32, 16>}, {pipeline_mode = #tpu.pipeline_mode<synchronous>, transform_indices = @transform_7, window_bounds = array<i64: 1, 16>}, {pipeline_mode = #tpu.pipeline_mode<synchronous>, transform_indices = @transform_8, window_bounds = array<i64: 1, 16>}, {pipeline_mode = #tpu.pipeline_mode<synchronous>, transform_indices = @transform_9, window_bounds = array<i64: 1, 1>}, {pipeline_mode = #tpu.pipeline_mode<synchronous>, transform_indices = @transform_10, window_bounds = array<i64: 3, 2, 128>}, {pipeline_mode = #tpu.pipeline_mode<synchronous>, transform_indices = @transform_11, window_bounds = array<i64: 2, 128>}, {pipeline_mode = #tpu.pipeline_mode<synchronous>, transform_indices = @transform_12, window_bounds = array<i64: 1, 128>}, {pipeline_mode = #tpu.pipeline_mode<synchronous>, transform_indices = @transform_13, window_bounds = array<i64: 2, 16, 32>}]} {
    %c0_i32 = arith.constant 0 : i32
    %0 = arith.cmpi eq, %arg0, %c0_i32 : i32
    %1 = arith.extui %0 : i1 to i32
    %c0_i32_0 = arith.constant 0 : i32
    %2 = arith.cmpi ne, %1, %c0_i32_0 : i32
    scf.if %2 {
      %c0_4 = arith.constant 0 : index
      %c0_5 = arith.constant 0 : index
      %c0_6 = arith.constant 0 : index
      %11 = vector.load %arg3[%c0_4, %c0_5, %c0_6] : memref<2x16x32xf32, #tpu.memory_space<vmem>>, vector<2x16x32xf32>
      %12 = vector.shape_cast %11 : vector<2x16x32xf32> to vector<32x32xf32>
      %c0_7 = arith.constant 0 : index
      %c0_8 = arith.constant 0 : index
      %13 = vector.load %arg5[%c0_7, %c0_8] : memref<32x32xf32, #tpu.memory_space<vmem>>, vector<32x32xf32>
      %cst_9 = arith.constant dense<0.000000e+00> : vector<32x32xf32>
      %14 = tpu.matmul %12, %13, %cst_9 {dimension_numbers = #tpu.dot_dimension_numbers<[1], [0], [0], [1], [0, 0, 1, 1], [], []>} : vector<32x32xf32>, vector<32x32xf32>, vector<32x32xf32> -> vector<32x32xf32>
      %c0_10 = arith.constant 0 : index
      %c0_11 = arith.constant 0 : index
      %15 = vector.load %arg6[%c0_10, %c0_11] : memref<1x32xf32, #tpu.memory_space<vmem>>, vector<1x32xf32>
      %16 = vector.broadcast %15 : vector<1x32xf32> to vector<32x32xf32>
      %17 = arith.addf %14, %16 : vector<32x32xf32>
      %18 = math.tanh %17 : vector<32x32xf32>
      %19 = vector.shape_cast %18 : vector<32x32xf32> to vector<2x16x32xf32>
      %c0_12 = arith.constant 0 : index
      %c0_13 = arith.constant 0 : index
      %c0_14 = arith.constant 0 : index
      %20 = vector.load %arg14[%c0_12, %c0_13, %c0_14] : memref<2x16x32xf32, #tpu.memory_space<vmem>>, vector<2x16x32xf32>
      tpu.vector_store %arg14[%c0_12, %c0_13, %c0_14], %19 {strides = array<i32>} : memref<2x16x32xf32, #tpu.memory_space<vmem>>, vector<2x16x32xf32>,
      %c0_15 = arith.constant 0 : index
      %c0_16 = arith.constant 0 : index
      %21 = vector.load %arg1[%c0_15, %c0_16] : memref<2x16xi32, #tpu.memory_space<vmem>>, vector<2x16xi32>
      %c0_i32_17 = arith.constant 0 : i32
      %22 = vector.broadcast %c0_i32_17 : i32 to vector<2x16xi32>
      %23 = arith.cmpi eq, %21, %22 : vector<2x16xi32>
      %24 = arith.extui %23 : vector<2x16xi1> to vector<2x16xi32>
      %25 = arith.sitofp %24 : vector<2x16xi32> to vector<2x16xf32>
      %26 = vector.shape_cast %25 : vector<2x16xf32> to vector<2x16x1xf32>
      %27 = vector.broadcast %26 : vector<2x16x1xf32> to vector<2x16x32xf32>
      %28 = arith.mulf %19, %27 : vector<2x16x32xf32>
      %cst_18 = arith.constant dense<0.000000e+00> : vector<2x32xf32>
      %29 = vector.multi_reduction <add>, %28, %cst_18 [1] : vector<2x16x32xf32> to vector<2x32xf32>
      %c0_19 = arith.constant 0 : index
      %c0_20 = arith.constant 0 : index
      %30 = vector.load %arg17[%c0_19, %c0_20] : memref<2x32xf32, #tpu.memory_space<vmem>>, vector<2x32xf32>
      tpu.vector_store %arg17[%c0_19, %c0_20], %29 {strides = array<i32>} : memref<2x32xf32, #tpu.memory_space<vmem>>, vector<2x32xf32>,
      %cst_21 = arith.constant dense<0.000000e+00> : vector<2xf32>
      %31 = vector.multi_reduction <add>, %25, %cst_21 [1] : vector<2x16xf32> to vector<2xf32>
      %32 = vector.shape_cast %31 : vector<2xf32> to vector<2x1xf32>
      %c0_22 = arith.constant 0 : index
      %c0_23 = arith.constant 0 : index
      %33 = vector.load %arg18[%c0_22, %c0_23] : memref<2x1xf32, #tpu.memory_space<vmem>>, vector<2x1xf32>
      tpu.vector_store %arg18[%c0_22, %c0_23], %32 {strides = array<i32>} : memref<2x1xf32, #tpu.memory_space<vmem>>, vector<2x1xf32>,
      %34 = tpu.iota {dimensions = array<i32: 1>} : vector<2x4x16xi32>
      %c3_i32 = arith.constant 3 : i32
      %35 = vector.broadcast %c3_i32 : i32 to vector<2x4x16xi32>
      %36 = arith.cmpi slt, %34, %35 : vector<2x4x16xi32>
      %37 = vector.shape_cast %21 : vector<2x16xi32> to vector<2x1x16xi32>
      %c1_i32 = arith.constant 1 : i32
      %38 = vector.broadcast %c1_i32 : i32 to vector<2x4x16xi32>
      %39 = arith.addi %34, %38 : vector<2x4x16xi32>
      %40 = vector.broadcast %37 : vector<2x1x16xi32> to vector<2x4x16xi32>
      %41 = arith.cmpi eq, %40, %39 : vector<2x4x16xi32>
      %42 = arith.extui %41 : vector<2x4x16xi1> to vector<2x4x16xi32>
      %43 = arith.sitofp %42 : vector<2x4x16xi32> to vector<2x4x16xf32>
      %cst_24 = arith.constant 0.000000e+00 : f32
      %44 = vector.broadcast %cst_24 : f32 to vector<2x4x16xf32>
      %45 = arith.select %36, %43, %44 : vector<2x4x16xi1>, vector<2x4x16xf32>
      "tpu.trace_start"() <{level = 10 : i32, message = "bns,bsh->bnh"}> : () -> ()
      %cst_25 = arith.constant dense<0.000000e+00> : vector<2x4x32xf32>
      %46 = tpu.matmul %45, %19, %cst_25 {dimension_numbers = #tpu.dot_dimension_numbers<[2], [1], [1], [2], [0, 0, 0, 1, 1, 2], [0], [0]>} : vector<2x4x16xf32>, vector<2x16x32xf32>, vector<2x4x32xf32> -> vector<2x4x32xf32>
      "tpu.trace_stop"() : () -> ()
      %cst_26 = arith.constant dense<0.000000e+00> : vector<2x4xf32>
      %47 = vector.multi_reduction <add>, %45, %cst_26 [2] : vector<2x4x16xf32> to vector<2x4xf32>
      %48 = tpu.iota {dimensions = array<i32: 1>} : vector<2x4xi32>
      %c3_i32_27 = arith.constant 3 : i32
      %49 = vector.broadcast %c3_i32_27 : i32 to vector<2x4xi32>
      %50 = arith.cmpi eq, %48, %49 : vector<2x4xi32>
      %51 = arith.extui %50 : vector<2x4xi1> to vector<2x4xi32>
      %52 = arith.sitofp %51 : vector<2x4xi32> to vector<2x4xf32>
      %53 = vector.shape_cast %52 : vector<2x4xf32> to vector<2x4x1xf32>
      %c0_28 = arith.constant 0 : index
      %c0_29 = arith.constant 0 : index
      %54 = vector.load %arg4[%c0_28, %c0_29] : memref<1x32xf32, #tpu.memory_space<vmem>>, vector<1x32xf32>
      %55 = vector.shape_cast %54 : vector<1x32xf32> to vector<1x1x32xf32>
      %56 = vector.broadcast %53 : vector<2x4x1xf32> to vector<2x4x32xf32>
      %57 = vector.broadcast %55 : vector<1x1x32xf32> to vector<2x4x32xf32>
      %58 = arith.mulf %56, %57 : vector<2x4x32xf32>
      %59 = arith.addf %46, %58 : vector<2x4x32xf32>
      %c0_30 = arith.constant 0 : index
      %c0_31 = arith.constant 0 : index
      %c0_32 = arith.constant 0 : index
      %60 = vector.load %arg15[%c0_30, %c0_31, %c0_32] : memref<2x4x32xf32, #tpu.memory_space<vmem>>, vector<2x4x32xf32>
      tpu.vector_store %arg15[%c0_30, %c0_31, %c0_32], %59 {strides = array<i32>} : memref<2x4x32xf32, #tpu.memory_space<vmem>>, vector<2x4x32xf32>,
      %61 = arith.addf %47, %52 : vector<2x4xf32>
      %c0_33 = arith.constant 0 : index
      %c0_34 = arith.constant 0 : index
      %62 = vector.load %arg16[%c0_33, %c0_34] : memref<2x4xf32, #tpu.memory_space<vmem>>, vector<2x4xf32>
      tpu.vector_store %arg16[%c0_33, %c0_34], %61 {strides = array<i32>} : memref<2x4xf32, #tpu.memory_space<vmem>>, vector<2x4xf32>,
      %cst_35 = arith.constant 1.000000e+00 : f32
      %63 = vector.broadcast %cst_35 : f32 to vector<2x4xf32>
      %c0_36 = arith.constant 0 : index
      %c0_37 = arith.constant 0 : index
      %64 = vector.load %arg19[%c0_36, %c0_37] : memref<2x4xf32, #tpu.memory_space<vmem>>, vector<2x4xf32>
      tpu.vector_store %arg19[%c0_36, %c0_37], %63 {strides = array<i32>} : memref<2x4xf32, #tpu.memory_space<vmem>>, vector<2x4xf32>,
      %cst_38 = arith.constant 0.000000e+00 : f32
      %65 = vector.broadcast %cst_38 : f32 to vector<2x4xf32>
      %c0_39 = arith.constant 0 : index
      %c0_40 = arith.constant 0 : index
      %66 = vector.load %arg20[%c0_39, %c0_40] : memref<2x4xf32, #tpu.memory_space<vmem>>, vector<2x4xf32>
      tpu.vector_store %arg20[%c0_39, %c0_40], %65 {strides = array<i32>} : memref<2x4xf32, #tpu.memory_space<vmem>>, vector<2x4xf32>,
      %cst_41 = arith.constant 0.000000e+00 : f32
      %67 = vector.broadcast %cst_41 : f32 to vector<1x1xf32>
      %c0_42 = arith.constant 0 : index
      %c0_43 = arith.constant 0 : index
      %68 = vector.load %arg21[%c0_42, %c0_43] : memref<1x1xf32, #tpu.memory_space<vmem>>, vector<1x1xf32>
      tpu.vector_store %arg21[%c0_42, %c0_43], %67 {strides = array<i32>} : memref<1x1xf32, #tpu.memory_space<vmem>>, vector<1x1xf32>,
      %cst_44 = arith.constant 0.000000e+00 : f32
      %69 = vector.broadcast %cst_44 : f32 to vector<1x1xf32>
      %c0_45 = arith.constant 0 : index
      %c0_46 = arith.constant 0 : index
      %70 = vector.load %arg22[%c0_45, %c0_46] : memref<1x1xf32, #tpu.memory_space<vmem>>, vector<1x1xf32>
      tpu.vector_store %arg22[%c0_45, %c0_46], %69 {strides = array<i32>} : memref<1x1xf32, #tpu.memory_space<vmem>>, vector<1x1xf32>,
      %cst_47 = arith.constant 0.000000e+00 : f32
      %71 = vector.broadcast %cst_47 : f32 to vector<3x2x128xf32>
      %c0_48 = arith.constant 0 : index
      %c0_49 = arith.constant 0 : index
      %c0_50 = arith.constant 0 : index
      %72 = vector.load %arg11[%c0_48, %c0_49, %c0_50] : memref<3x2x128xf32, #tpu.memory_space<vmem>>, vector<3x2x128xf32>
      tpu.vector_store %arg11[%c0_48, %c0_49, %c0_50], %71 {strides = array<i32>} : memref<3x2x128xf32, #tpu.memory_space<vmem>>, vector<3x2x128xf32>,
    } else {
    }
    %c0 = arith.constant 0 : index
    %c0_1 = arith.constant 0 : index
    %3 = vector.load %arg21[%c0, %c0_1] : memref<1x1xf32, #tpu.memory_space<vmem>>, vector<1x1xf32>
    %4 = vector.extract %3[0, 0] : f32 from vector<1x1xf32>
    %cst = arith.constant 5.000000e-01 : f32
    %5 = arith.cmpf olt, %4, %cst : f32
    %6 = arith.extui %5 : i1 to i32
    %c0_i32_2 = arith.constant 0 : i32
    %7 = arith.cmpi ne, %6, %c0_i32_2 : i32
    scf.if %7 {
      %c0_4 = arith.constant 0 : index
      %c0_5 = arith.constant 0 : index
      %c0_6 = arith.constant 0 : index
      %11 = vector.load %arg15[%c0_4, %c0_5, %c0_6] : memref<2x4x32xf32, #tpu.memory_space<vmem>>, vector<2x4x32xf32>
      %c0_7 = arith.constant 0 : index
      %c0_8 = arith.constant 0 : index
      %12 = vector.load %arg16[%c0_7, %c0_8] : memref<2x4xf32, #tpu.memory_space<vmem>>, vector<2x4xf32>
      %c0_9 = arith.constant 0 : index
      %c0_10 = arith.constant 0 : index
      %13 = vector.load %arg17[%c0_9, %c0_10] : memref<2x32xf32, #tpu.memory_space<vmem>>, vector<2x32xf32>
      %c0_11 = arith.constant 0 : index
      %c0_12 = arith.constant 0 : index
      %14 = vector.load %arg18[%c0_11, %c0_12] : memref<2x1xf32, #tpu.memory_space<vmem>>, vector<2x1xf32>
      %c0_13 = arith.constant 0 : index
      %c0_14 = arith.constant 0 : index
      %15 = vector.load %arg19[%c0_13, %c0_14] : memref<2x4xf32, #tpu.memory_space<vmem>>, vector<2x4xf32>
      %16 = vector.shape_cast %13 : vector<2x32xf32> to vector<2x1x32xf32>
      %17 = vector.broadcast %16 : vector<2x1x32xf32> to vector<2x4x32xf32>
      %18 = arith.addf %17, %11 : vector<2x4x32xf32>
      %19 = vector.broadcast %14 : vector<2x1xf32> to vector<2x4xf32>
      %20 = arith.addf %19, %12 : vector<2x4xf32>
      %21 = tpu.reciprocal %20 {approx = true} : vector<2x4xf32> -> vector<2x4xf32>
      %22 = vector.shape_cast %21 : vector<2x4xf32> to vector<2x4x1xf32>
      %23 = vector.broadcast %22 : vector<2x4x1xf32> to vector<2x4x32xf32>
      %24 = arith.mulf %18, %23 : vector<2x4x32xf32>
      %25 = vector.shape_cast %24 : vector<2x4x32xf32> to vector<8x32xf32>
      %c0_15 = arith.constant 0 : index
      %c0_16 = arith.constant 0 : index
      %26 = vector.load %arg7[%c0_15, %c0_16] : memref<32x16xf32, #tpu.memory_space<vmem>>, vector<32x16xf32>
      %cst_17 = arith.constant dense<0.000000e+00> : vector<8x16xf32>
      %27 = tpu.matmul %25, %26, %cst_17 {dimension_numbers = #tpu.dot_dimension_numbers<[1], [0], [0], [1], [0, 0, 1, 1], [], []>} : vector<8x32xf32>, vector<32x16xf32>, vector<8x16xf32> -> vector<8x16xf32>
      %c0_18 = arith.constant 0 : index
      %c0_19 = arith.constant 0 : index
      %28 = vector.load %arg8[%c0_18, %c0_19] : memref<1x16xf32, #tpu.memory_space<vmem>>, vector<1x16xf32>
      %29 = vector.broadcast %28 : vector<1x16xf32> to vector<8x16xf32>
      %30 = arith.addf %27, %29 : vector<8x16xf32>
      %cst_20 = arith.constant 0.000000e+00 : f32
      %31 = vector.broadcast %cst_20 : f32 to vector<8x16xf32>
      %32 = arith.maximumf %30, %31 : vector<8x16xf32>
      %c0_21 = arith.constant 0 : index
      %c0_22 = arith.constant 0 : index
      %33 = vector.load %arg9[%c0_21, %c0_22] : memref<1x16xf32, #tpu.memory_space<vmem>>, vector<1x16xf32>
      %34 = vector.broadcast %33 : vector<1x16xf32> to vector<8x16xf32>
      %35 = arith.mulf %32, %34 : vector<8x16xf32>
      %cst_23 = arith.constant dense<0.000000e+00> : vector<8xf32>
      %36 = vector.multi_reduction <add>, %35, %cst_23 [1] : vector<8x16xf32> to vector<8xf32>
      %37 = vector.shape_cast %36 : vector<8xf32> to vector<8x1xf32>
      %c0_24 = arith.constant 0 : index
      %c0_25 = arith.constant 0 : index
      %38 = vector.load %arg10[%c0_24, %c0_25] : memref<1x1xf32, #tpu.memory_space<vmem>>, vector<1x1xf32>
      %39 = vector.broadcast %38 : vector<1x1xf32> to vector<8x1xf32>
      %40 = arith.addf %37, %39 : vector<8x1xf32>
      %41 = vector.shape_cast %40 : vector<8x1xf32> to vector<2x4xf32>
      %cst_26 = arith.constant 0.000000e+00 : f32
      %42 = vector.broadcast %cst_26 : f32 to vector<2x4xf32>
      %43 = arith.cmpf ogt, %15, %42 : vector<2x4xf32>
      %cst_27 = arith.constant -1.000000e+09 : f32
      %44 = vector.broadcast %cst_27 : f32 to vector<2x4xf32>
      %45 = arith.select %43, %41, %44 : vector<2x4xi1>, vector<2x4xf32>
      %46 = tpu.iota {dimensions = array<i32: 1>} : vector<2x4xi32>
      %cst_28 = arith.constant dense<0xFF800000> : vector<2xf32>
      %47 = vector.multi_reduction <maximumf>, %45, %cst_28 [1] : vector<2x4xf32> to vector<2xf32>
      %48 = vector.shape_cast %47 : vector<2xf32> to vector<2x1xf32>
      %49 = vector.broadcast %48 : vector<2x1xf32> to vector<2x4xf32>
      %50 = arith.cmpf oge, %45, %49 : vector<2x4xf32>
      %c4_i32 = arith.constant 4 : i32
      %51 = vector.broadcast %c4_i32 : i32 to vector<2x4xi32>
      %52 = arith.select %50, %46, %51 : vector<2x4xi1>, vector<2x4xi32>
      %cst_29 = arith.constant dense<2147483647> : vector<2xi32>
      %53 = vector.multi_reduction <minsi>, %52, %cst_29 [1] : vector<2x4xi32> to vector<2xi32>
      %54 = vector.shape_cast %53 : vector<2xi32> to vector<2x1xi32>
      %55 = vector.broadcast %54 : vector<2x1xi32> to vector<2x4xi32>
      %56 = arith.cmpi eq, %46, %55 : vector<2x4xi32>
      %57 = arith.extui %56 : vector<2x4xi1> to vector<2x4xi32>
      %58 = arith.sitofp %57 : vector<2x4xi32> to vector<2x4xf32>
      %59 = vector.extract_strided_slice %58 {offsets = [0, 3], sizes = [1, 1], strides = [1, 1]} : vector<2x4xf32> to vector<1x1xf32>
      %cst_30 = arith.constant 0.000000e+00 : f32
      %60 = vector.broadcast %cst_30 : f32 to vector<1x1xf32>
      %61 = arith.cmpf ogt, %59, %60 : vector<1x1xf32>
      %cst_31 = arith.constant 1.000000e+00 : f32
      %62 = vector.broadcast %cst_31 : f32 to vector<2x4xf32>
      %63 = arith.subf %62, %58 : vector<2x4xf32>
      %64 = arith.mulf %63, %15 : vector<2x4xf32>
      %65 = vector.shape_cast %61 : vector<1x1xi1> to vector<1x1xi1>
      %66 = vector.broadcast %65 : vector<1x1xi1> to vector<2x4xi1>
      %67 = arith.select %66, %15, %64 : vector<2x4xi1>, vector<2x4xf32>
      %c0_32 = arith.constant 0 : index
      %c0_33 = arith.constant 0 : index
      %68 = vector.load %arg19[%c0_32, %c0_33] : memref<2x4xf32, #tpu.memory_space<vmem>>, vector<2x4xf32>
      tpu.vector_store %arg19[%c0_32, %c0_33], %67 {strides = array<i32>} : memref<2x4xf32, #tpu.memory_space<vmem>>, vector<2x4xf32>,
      %69 = vector.shape_cast %58 : vector<2x4xf32> to vector<2x4x1xf32>
      %70 = vector.broadcast %69 : vector<2x4x1xf32> to vector<2x4x32xf32>
      %71 = arith.mulf %70, %18 : vector<2x4x32xf32>
      %cst_34 = arith.constant dense<0.000000e+00> : vector<2x32xf32>
      %72 = vector.multi_reduction <add>, %71, %cst_34 [1] : vector<2x4x32xf32> to vector<2x32xf32>
      %c0_35 = arith.constant 0 : index
      %c0_36 = arith.constant 0 : index
      %73 = vector.load %arg17[%c0_35, %c0_36] : memref<2x32xf32, #tpu.memory_space<vmem>>, vector<2x32xf32>
      tpu.vector_store %arg17[%c0_35, %c0_36], %72 {strides = array<i32>} : memref<2x32xf32, #tpu.memory_space<vmem>>, vector<2x32xf32>,
      %74 = arith.mulf %58, %20 : vector<2x4xf32>
      %cst_37 = arith.constant dense<0.000000e+00> : vector<2xf32>
      %75 = vector.multi_reduction <add>, %74, %cst_37 [1] : vector<2x4xf32> to vector<2xf32>
      %76 = vector.shape_cast %75 : vector<2xf32> to vector<2x1xf32>
      %c0_38 = arith.constant 0 : index
      %c0_39 = arith.constant 0 : index
      %77 = vector.load %arg18[%c0_38, %c0_39] : memref<2x1xf32, #tpu.memory_space<vmem>>, vector<2x1xf32>
      tpu.vector_store %arg18[%c0_38, %c0_39], %76 {strides = array<i32>} : memref<2x1xf32, #tpu.memory_space<vmem>>, vector<2x1xf32>,
      %c0_40 = arith.constant 0 : index
      %c0_41 = arith.constant 0 : index
      %78 = vector.load %arg20[%c0_40, %c0_41] : memref<2x4xf32, #tpu.memory_space<vmem>>, vector<2x4xf32>
      %79 = arith.addf %78, %58 : vector<2x4xf32>
      %c0_42 = arith.constant 0 : index
      %c0_43 = arith.constant 0 : index
      %80 = vector.load %arg20[%c0_42, %c0_43] : memref<2x4xf32, #tpu.memory_space<vmem>>, vector<2x4xf32>
      tpu.vector_store %arg20[%c0_42, %c0_43], %79 {strides = array<i32>} : memref<2x4xf32, #tpu.memory_space<vmem>>, vector<2x4xf32>,
      %c0_44 = arith.constant 0 : index
      %c0_45 = arith.constant 0 : index
      %81 = vector.load %arg22[%c0_44, %c0_45] : memref<1x1xf32, #tpu.memory_space<vmem>>, vector<1x1xf32>
      %cst_46 = arith.constant 1.000000e+00 : f32
      %82 = vector.broadcast %cst_46 : f32 to vector<1x1xf32>
      %83 = arith.addf %81, %82 : vector<1x1xf32>
      %c0_47 = arith.constant 0 : index
      %c0_48 = arith.constant 0 : index
      %84 = vector.load %arg22[%c0_47, %c0_48] : memref<1x1xf32, #tpu.memory_space<vmem>>, vector<1x1xf32>
      tpu.vector_store %arg22[%c0_47, %c0_48], %83 {strides = array<i32>} : memref<1x1xf32, #tpu.memory_space<vmem>>, vector<1x1xf32>,
      %c0_49 = arith.constant 0 : index
      %c0_50 = arith.constant 0 : index
      %85 = vector.load %arg21[%c0_49, %c0_50] : memref<1x1xf32, #tpu.memory_space<vmem>>, vector<1x1xf32>
      %86 = arith.addf %85, %59 : vector<1x1xf32>
      %c0_51 = arith.constant 0 : index
      %c0_52 = arith.constant 0 : index
      %87 = vector.load %arg21[%c0_51, %c0_52] : memref<1x1xf32, #tpu.memory_space<vmem>>, vector<1x1xf32>
      tpu.vector_store %arg21[%c0_51, %c0_52], %86 {strides = array<i32>} : memref<1x1xf32, #tpu.memory_space<vmem>>, vector<1x1xf32>,
      %88 = tpu.iota {dimensions = array<i32: 1>} : vector<2x128xi32>
      %cst_53 = arith.constant 0.000000e+00 : f32
      %89 = vector.broadcast %cst_53 : f32 to vector<2x128xf32>
      %c0_i32_54 = arith.constant 0 : i32
      %90 = vector.broadcast %c0_i32_54 : i32 to vector<2x128xi32>
      %91 = arith.cmpi eq, %88, %90 : vector<2x128xi32>
      %92 = vector.extract_strided_slice %45 {offsets = [0, 0], sizes = [2, 1], strides = [1, 1]} : vector<2x4xf32> to vector<2x1xf32>
      %93 = vector.shape_cast %92 : vector<2x1xf32> to vector<2x1xf32>
      %94 = vector.broadcast %93 : vector<2x1xf32> to vector<2x128xf32>
      %95 = arith.select %91, %94, %89 : vector<2x128xi1>, vector<2x128xf32>
      %c1_i32 = arith.constant 1 : i32
      %96 = vector.broadcast %c1_i32 : i32 to vector<2x128xi32>
      %97 = arith.cmpi eq, %88, %96 : vector<2x128xi32>
      %98 = vector.extract_strided_slice %45 {offsets = [0, 1], sizes = [2, 1], strides = [1, 1]} : vector<2x4xf32> to vector<2x1xf32>
      %99 = vector.shape_cast %98 : vector<2x1xf32> to vector<2x1xf32>
      %100 = vector.broadcast %99 : vector<2x1xf32> to vector<2x128xf32>
      %101 = arith.select %97, %100, %95 : vector<2x128xi1>, vector<2x128xf32>
      %c2_i32_55 = arith.constant 2 : i32
      %102 = vector.broadcast %c2_i32_55 : i32 to vector<2x128xi32>
      %103 = arith.cmpi eq, %88, %102 : vector<2x128xi32>
      %104 = vector.extract_strided_slice %45 {offsets = [0, 2], sizes = [2, 1], strides = [1, 1]} : vector<2x4xf32> to vector<2x1xf32>
      %105 = vector.shape_cast %104 : vector<2x1xf32> to vector<2x1xf32>
      %106 = vector.broadcast %105 : vector<2x1xf32> to vector<2x128xf32>
      %107 = arith.select %103, %106, %101 : vector<2x128xi1>, vector<2x128xf32>
      %c3_i32 = arith.constant 3 : i32
      %108 = vector.broadcast %c3_i32 : i32 to vector<2x128xi32>
      %109 = arith.cmpi eq, %88, %108 : vector<2x128xi32>
      %110 = vector.extract_strided_slice %45 {offsets = [0, 3], sizes = [2, 1], strides = [1, 1]} : vector<2x4xf32> to vector<2x1xf32>
      %111 = vector.shape_cast %110 : vector<2x1xf32> to vector<2x1xf32>
      %112 = vector.broadcast %111 : vector<2x1xf32> to vector<2x128xf32>
      %113 = arith.select %109, %112, %107 : vector<2x128xi1>, vector<2x128xf32>
      %114 = arith.index_cast %arg0 : i32 to index
      %c0_56 = arith.constant 0 : index
      %c0_57 = arith.constant 0 : index
      %115 = vector.load %arg11[%114, %c0_56, %c0_57] : memref<3x2x128xf32, #tpu.memory_space<vmem>>, vector<1x2x128xf32>
      %116 = vector.shape_cast %115 : vector<1x2x128xf32> to vector<2x128xf32>
      %117 = vector.shape_cast %113 : vector<2x128xf32> to vector<1x2x128xf32>
      tpu.vector_store %arg11[%114, %c0_56, %c0_57], %117 {strides = array<i32>} : memref<3x2x128xf32, #tpu.memory_space<vmem>>, vector<1x2x128xf32>,
    } else {
    }
    %c2_i32 = arith.constant 2 : i32
    %8 = arith.cmpi eq, %arg0, %c2_i32 : i32
    %9 = arith.extui %8 : i1 to i32
    %c0_i32_3 = arith.constant 0 : i32
    %10 = arith.cmpi ne, %9, %c0_i32_3 : i32
    scf.if %10 {
      %c0_4 = arith.constant 0 : index
      %c0_5 = arith.constant 0 : index
      %11 = vector.load %arg20[%c0_4, %c0_5] : memref<2x4xf32, #tpu.memory_space<vmem>>, vector<2x4xf32>
      %cst_6 = arith.constant 1.000000e+00 : f32
      %12 = vector.broadcast %cst_6 : f32 to vector<2x4xf32>
      %13 = arith.minimumf %11, %12 : vector<2x4xf32>
      %c0_7 = arith.constant 0 : index
      %c0_8 = arith.constant 0 : index
      %14 = vector.load %arg2[%c0_7, %c0_8] : memref<2x128xi32, #tpu.memory_space<vmem>>, vector<2x128xi32>
      %c0_i32_9 = arith.constant 0 : i32
      %15 = vector.broadcast %c0_i32_9 : i32 to vector<2x128xi32>
      %16 = arith.cmpi eq, %14, %15 : vector<2x128xi32>
      %17 = arith.extui %16 : vector<2x128xi1> to vector<2x128xi32>
      %18 = arith.sitofp %17 : vector<2x128xi32> to vector<2x128xf32>
      %19 = vector.extract_strided_slice %13 {offsets = [0, 0], sizes = [2, 1], strides = [1, 1]} : vector<2x4xf32> to vector<2x1xf32>
      %c1_i32 = arith.constant 1 : i32
      %20 = vector.broadcast %c1_i32 : i32 to vector<2x128xi32>
      %21 = arith.cmpi eq, %14, %20 : vector<2x128xi32>
      %22 = arith.extui %21 : vector<2x128xi1> to vector<2x128xi32>
      %23 = arith.sitofp %22 : vector<2x128xi32> to vector<2x128xf32>
      %24 = vector.broadcast %19 : vector<2x1xf32> to vector<2x128xf32>
      %25 = arith.mulf %24, %23 : vector<2x128xf32>
      %26 = arith.addf %18, %25 : vector<2x128xf32>
      %27 = vector.extract_strided_slice %13 {offsets = [0, 1], sizes = [2, 1], strides = [1, 1]} : vector<2x4xf32> to vector<2x1xf32>
      %c2_i32_10 = arith.constant 2 : i32
      %28 = vector.broadcast %c2_i32_10 : i32 to vector<2x128xi32>
      %29 = arith.cmpi eq, %14, %28 : vector<2x128xi32>
      %30 = arith.extui %29 : vector<2x128xi1> to vector<2x128xi32>
      %31 = arith.sitofp %30 : vector<2x128xi32> to vector<2x128xf32>
      %32 = vector.broadcast %27 : vector<2x1xf32> to vector<2x128xf32>
      %33 = arith.mulf %32, %31 : vector<2x128xf32>
      %34 = arith.addf %26, %33 : vector<2x128xf32>
      %35 = vector.extract_strided_slice %13 {offsets = [0, 2], sizes = [2, 1], strides = [1, 1]} : vector<2x4xf32> to vector<2x1xf32>
      %c3_i32 = arith.constant 3 : i32
      %36 = vector.broadcast %c3_i32 : i32 to vector<2x128xi32>
      %37 = arith.cmpi eq, %14, %36 : vector<2x128xi32>
      %38 = arith.extui %37 : vector<2x128xi1> to vector<2x128xi32>
      %39 = arith.sitofp %38 : vector<2x128xi32> to vector<2x128xf32>
      %40 = vector.broadcast %35 : vector<2x1xf32> to vector<2x128xf32>
      %41 = arith.mulf %40, %39 : vector<2x128xf32>
      %42 = arith.addf %34, %41 : vector<2x128xf32>
      %43 = vector.extract_strided_slice %13 {offsets = [0, 3], sizes = [2, 1], strides = [1, 1]} : vector<2x4xf32> to vector<2x1xf32>
      %c4_i32 = arith.constant 4 : i32
      %44 = vector.broadcast %c4_i32 : i32 to vector<2x128xi32>
      %45 = arith.cmpi eq, %14, %44 : vector<2x128xi32>
      %46 = arith.extui %45 : vector<2x128xi1> to vector<2x128xi32>
      %47 = arith.sitofp %46 : vector<2x128xi32> to vector<2x128xf32>
      %48 = vector.broadcast %43 : vector<2x1xf32> to vector<2x128xf32>
      %49 = arith.mulf %48, %47 : vector<2x128xf32>
      %50 = arith.addf %42, %49 : vector<2x128xf32>
      %cst_11 = arith.constant 5.000000e-01 : f32
      %51 = vector.broadcast %cst_11 : f32 to vector<2x128xf32>
      %52 = arith.cmpf ogt, %50, %51 : vector<2x128xf32>
      %53 = arith.extui %52 : vector<2x128xi1> to vector<2x128xi32>
      %54 = arith.sitofp %53 : vector<2x128xi32> to vector<2x128xf32>
      %c0_12 = arith.constant 0 : index
      %c0_13 = arith.constant 0 : index
      %55 = vector.load %arg12[%c0_12, %c0_13] : memref<2x128xf32, #tpu.memory_space<vmem>>, vector<2x128xf32>
      tpu.vector_store %arg12[%c0_12, %c0_13], %54 {strides = array<i32>} : memref<2x128xf32, #tpu.memory_space<vmem>>, vector<2x128xf32>,
      %c0_14 = arith.constant 0 : index
      %c0_15 = arith.constant 0 : index
      %56 = vector.load %arg22[%c0_14, %c0_15] : memref<1x1xf32, #tpu.memory_space<vmem>>, vector<1x1xf32>
      %57 = vector.shape_cast %56 : vector<1x1xf32> to vector<1x1xf32>
      %58 = vector.broadcast %57 : vector<1x1xf32> to vector<1x128xf32>
      %c0_16 = arith.constant 0 : index
      %c0_17 = arith.constant 0 : index
      %59 = vector.load %arg13[%c0_16, %c0_17] : memref<1x128xf32, #tpu.memory_space<vmem>>, vector<1x128xf32>
      tpu.vector_store %arg13[%c0_16, %c0_17], %58 {strides = array<i32>} : memref<1x128xf32, #tpu.memory_space<vmem>>, vector<1x128xf32>,
    } else {
    }
    return
  }
  func.func @transform_0(%arg0: i32) -> (i32, i32) {
    %c0_i32 = arith.constant 0 : i32
    %c0_i32_0 = arith.constant 0 : i32
    %c0_i32_1 = arith.constant 0 : i32
    return %c0_i32, %c0_i32_0 : i32, i32
  }
  func.func @transform_1(%arg0: i32) -> (i32, i32) {
    %c0_i32 = arith.constant 0 : i32
    %c0_i32_0 = arith.constant 0 : i32
    %c0_i32_1 = arith.constant 0 : i32
    return %c0_i32, %c0_i32_0 : i32, i32
  }
  func.func @transform_2(%arg0: i32) -> (i32, i32, i32) {
    %c0_i32 = arith.constant 0 : i32
    %c0_i32_0 = arith.constant 0 : i32
    %c0_i32_1 = arith.constant 0 : i32
    %c0_i32_2 = arith.constant 0 : i32
    return %c0_i32, %c0_i32_0, %c0_i32_1 : i32, i32, i32
  }
  func.func @transform_3(%arg0: i32) -> (i32, i32) {
    %c0_i32 = arith.constant 0 : i32
    %c0_i32_0 = arith.constant 0 : i32
    %c0_i32_1 = arith.constant 0 : i32
    return %c0_i32, %c0_i32_0 : i32, i32
  }
  func.func @transform_4(%arg0: i32) -> (i32, i32) {
    %c0_i32 = arith.constant 0 : i32
    %c0_i32_0 = arith.constant 0 : i32
    %c0_i32_1 = arith.constant 0 : i32
    return %c0_i32, %c0_i32_0 : i32, i32
  }
  func.func @transform_5(%arg0: i32) -> (i32, i32) {
    %c0_i32 = arith.constant 0 : i32
    %c0_i32_0 = arith.constant 0 : i32
    %c0_i32_1 = arith.constant 0 : i32
    return %c0_i32, %c0_i32_0 : i32, i32
  }
  func.func @transform_6(%arg0: i32) -> (i32, i32) {
    %c0_i32 = arith.constant 0 : i32
    %c0_i32_0 = arith.constant 0 : i32
    %c0_i32_1 = arith.constant 0 : i32
    return %c0_i32, %c0_i32_0 : i32, i32
  }
  func.func @transform_7(%arg0: i32) -> (i32, i32) {
    %c0_i32 = arith.constant 0 : i32
    %c0_i32_0 = arith.constant 0 : i32
    %c0_i32_1 = arith.constant 0 : i32
    return %c0_i32, %c0_i32_0 : i32, i32
  }
  func.func @transform_8(%arg0: i32) -> (i32, i32) {
    %c0_i32 = arith.constant 0 : i32
    %c0_i32_0 = arith.constant 0 : i32
    %c0_i32_1 = arith.constant 0 : i32
    return %c0_i32, %c0_i32_0 : i32, i32
  }
  func.func @transform_9(%arg0: i32) -> (i32, i32) {
    %c0_i32 = arith.constant 0 : i32
    %c0_i32_0 = arith.constant 0 : i32
    %c0_i32_1 = arith.constant 0 : i32
    return %c0_i32, %c0_i32_0 : i32, i32
  }
  func.func @transform_10(%arg0: i32) -> (i32, i32, i32) {
    %c0_i32 = arith.constant 0 : i32
    %c0_i32_0 = arith.constant 0 : i32
    %c0_i32_1 = arith.constant 0 : i32
    %c0_i32_2 = arith.constant 0 : i32
    return %c0_i32, %c0_i32_0, %c0_i32_1 : i32, i32, i32
  }
  func.func @transform_11(%arg0: i32) -> (i32, i32) {
    %c0_i32 = arith.constant 0 : i32
    %c0_i32_0 = arith.constant 0 : i32
    %c0_i32_1 = arith.constant 0 : i32
    return %c0_i32, %c0_i32_0 : i32, i32
  }
  func.func @transform_12(%arg0: i32) -> (i32, i32) {
    %c0_i32 = arith.constant 0 : i32
    %c0_i32_0 = arith.constant 0 : i32
    %c0_i32_1 = arith.constant 0 : i32
    return %c0_i32, %c0_i32_0 : i32, i32
  }
  func.func @transform_13(%arg0: i32) -> (i32, i32, i32) {
    %c0_i32 = arith.constant 0 : i32
    %c0_i32_0 = arith.constant 0 : i32
    %c0_i32_1 = arith.constant 0 : i32
    %c0_i32_2 = arith.constant 0 : i32
    return %c0_i32, %c0_i32_0, %c0_i32_1 : i32, i32, i32
  }
}

</mosaic_0001>

<llo_original>
// kernel: squeeze.3
$region0: #{squeeze.3}
  %s0 = inlined_call_operand.vmem [shape: f32[32], index: 0, kind: input, shape index: {}]
  %s1 = inlined_call_operand.hbm [shape: f32[2,16], index: 1, kind: output, shape index: {}]
  $region1: #{squeeze.3} parent=0
    #allocation0 [shape = 'u8[1024]{0}', space=vmem, size = 0x400, scoped, tag = 'operand span for operand 1']
    #allocation1 [shape = 's32[1]{0}', space=sflag, size = 0x4, scoped, tag = 'scoped memory for squeeze.3']
    #allocation2 [shape = 'u8[4096]{0}', space=vmem, size = 0x1000, scoped, tag = 'scoped mem for output reshape']
    #allocation3 [shape = 'u8[4096]{0}', space=vmem, size = 0x1000, scoped, tag = 'scoped mem for input reshape']
    %2 = vsyncpa [#allocation1], 0
    %s4 = sshllo.u32 0, 1
    %v5 = vld [vmem:[%s0] sm:%s4]
    %6 = vst [vmem:[#allocation3] sm:%s4] %v5
    %v7 = vld [vmem:[#allocation3] sm:$0x1]
    %vm8 = vcmask 130048
    %9 = vst.msk [vmem:[#allocation2] sm:$0x1] %vm8, %v7
    %v10 = vld [vmem:[#allocation3] sm:$0x1]
    %11 = vrot.lane.b32.xlu0 %v10, 112
    %v12 = vpop.permute.xlu0 %11
    %vm13 = vcmask 130048
    %s14 = scalar_lea.vmem [#allocation2], 1
    %15 = vst.msk [vmem:[%s14] sm:$0x1] %vm13, %v12
    %s17 = sshllo.u32 0, 2
    %v19 = vld [vmem:[#allocation2] sm:%s17]
    %s20 = sshllo.u32 0, 2
    %21 = vst [vmem:[#allocation0] sm:%s20] %v19
    %s23 = ssub.s32 32, 32
    %24 = vsyncadd [#allocation1], %s23
    %s26 = sshll.u32 [#allocation0], 4
    %s27 = int_to_ptr.vmem [resolvable:$true] %s26
    %29 = dma.vmem_to_hbm [thread:$0]  %s27, 32, %s1, [#allocation1]
    %30 = dma.done [#allocation1], 32
    %31 = vsyncpa [#allocation1], 1

// kernel: _forward_core.3
$region0: #{_forward_core.3}
  #allocation0 [shape = 'u32[]', space=smem, size = 0x4, offset = 0x4, fixed_abs, tag = 'smem constant byte address 0x4 - core index']
  #allocation1 [shape = 'u32[144,128]{1,0:T(1,128)}', space=vmem, size = 0x12000, scoped, tag = 'internal scratch']
  %s0 = inlined_call_operand.vmem [shape: f32[32,32], index: 0, kind: input, shape index: {}]
  %s1 = inlined_call_operand.vmem [shape: f32[32,32], index: 1, kind: input, shape index: {}]
  %s2 = inlined_call_operand.vmem [shape: f32[1,32], index: 2, kind: input, shape index: {}]
  %s3 = inlined_call_operand.vmem [shape: f32[32,32], index: 3, kind: input, shape index: {}]
  %s4 = inlined_call_operand.vmem [shape: f32[32,128], index: 4, kind: input, shape index: {}]
  %s5 = inlined_call_operand.vmem [shape: f32[32,128], index: 5, kind: input, shape index: {}]
  %s6 = inlined_call_operand.vmem [shape: f32[1,128], index: 6, kind: input, shape index: {}]
  %s7 = inlined_call_operand.vmem [shape: f32[32,128], index: 7, kind: output, shape index: {}]
  %s8 = sld [smem:[#allocation0]]
  $region61: #{_forward_core.3} parent=0
    _
  %s10 = ssub.s32 1, %s8
  %s11 = scalar_select 0, %s10, %s8
  loop: start=0, step=1, limit=4
  $region2: #{_forward_core.3} parent=0 // loop_pre_header
    _
  $region3: #{_forward_core.3} parent=0 // loop_header
    %s13 = sphi 0, %s17
    %p14 = scmp.ge.s32.totalorder %s13, 4
    %s23 = sphi 0, %s25
    %s26 = sphi 0, %s23
    %s27 = sphi 0, %s26
    %s43 = sphi 0, %s27
    %s47 = sphi 0, %s47
    %s49 = sphi 0, %s47
    %s50 = sphi 0, %s49
    %s64 = sphi 0, %s50
    %s68 = sphi 0, %s68
    %s70 = sphi 0, %s68
    %s71 = sphi 0, %s70
    %s85 = sphi 0, %s71
    %s91 = sphi 0, %s93
    %s94 = sphi 0, %s91
    %s95 = sphi 0, %s94
    %s111 = sphi 0, %s95
    %s115 = sphi 0, %s115
    %s117 = sphi 0, %s115
    %s118 = sphi 0, %s117
    %s132 = sphi 0, %s118
    %s136 = sphi 0, %s136
    %s138 = sphi 0, %s136
    %s139 = sphi 0, %s138
    %s153 = sphi 0, %s139
    %s157 = sphi 0, %s157
    %s159 = sphi 0, %s157
    %s160 = sphi 0, %s159
    %s174 = sphi 0, %s160
    %s180 = sphi 0, %s182
    %s183 = sphi 0, %s180
    %s184 = sphi 0, %s183
    %s200 = sphi 0, %s184
  $region4: #{_forward_core.3} parent=0 // loop_header_branch
    %16 = sbr.rel (%p14) target = $region8
  $region5: #{_forward_core.3} parent=0 // loop_body
    %s18 = ssub.s32 %s13, 1
    %s19 = ssub.s32 %s13, 2
    %s20 = sadd.s32 %s13, 1
    %s21 = ssub.s32 %s13, %s20
    %p22 = scmp.eq.s32.totalorder %s21, 0
    %s24 = sadd.s32 %s23, 1
    %s25 = scalar_select %p22, %s23, %s24
    %p28 = pneg %p22
    %p29 = scmp.eq.s32.totalorder %s13, 1
    %p30 = por %p28, %p29
    %p31 = scmp.ne.s32.totalorder %s23, %s26
    %p32 = scmp.eq.s32.totalorder %s13, 0
    %p33 = por %p31, %p32
    %p34 = scmp.ne.s32.totalorder %s23, %s26
    %p35 = scmp.eq.s32.totalorder %s18, 1
    %p36 = por %p34, %p35
    %p37 = scmp.ne.s32.totalorder %s26, %s27
    %p38 = scmp.eq.s32.totalorder %s18, 0
    %p39 = por %p37, %p38
    %p40 = scmp.ne.s32.totalorder %s26, %s27
    %p41 = scmp.eq.s32.totalorder %s19, 1
    %p42 = por %p40, %p41
    %p44 = scmp.ne.s32.totalorder %s27, %s43
    %p45 = scmp.eq.s32.totalorder %s19, 0
    %p46 = por %p44, %p45
    %s48 = sadd.s32 %s47, 1
    %p51 = scmp.eq.s32.totalorder %s13, 1
    %p52 = scmp.ne.s32.totalorder %s47, %s49
    %p53 = scmp.eq.s32.totalorder %s13, 0
    %p54 = por %p52, %p53
    %p55 = scmp.ne.s32.totalorder %s47, %s49
    %p56 = scmp.eq.s32.totalorder %s18, 1
    %p57 = por %p55, %p56
    %p58 = scmp.ne.s32.totalorder %s49, %s50
    %p59 = scmp.eq.s32.totalorder %s18, 0
    %p60 = por %p58, %p59
    %p61 = scmp.ne.s32.totalorder %s49, %s50
    %p62 = scmp.eq.s32.totalorder %s19, 1
    %p63 = por %p61, %p62
    %p65 = scmp.ne.s32.totalorder %s50, %s64
    %p66 = scmp.eq.s32.totalorder %s19, 0
    %p67 = por %p65, %p66
    %s69 = sadd.s32 %s68, 1
    %p72 = scmp.eq.s32.totalorder %s13, 1
    %p73 = scmp.ne.s32.totalorder %s68, %s70
    %p74 = scmp.eq.s32.totalorder %s13, 0
    %p75 = por %p73, %p74
    %p76 = scmp.ne.s32.totalorder %s68, %s70
    %p77 = scmp.eq.s32.totalorder %s18, 1
    %p78 = por %p76, %p77
    %p79 = scmp.ne.s32.totalorder %s70, %s71
    %p80 = scmp.eq.s32.totalorder %s18, 0
    %p81 = por %p79, %p80
    %p82 = scmp.ne.s32.totalorder %s70, %s71
    %p83 = scmp.eq.s32.totalorder %s19, 1
    %p84 = por %p82, %p83
    %p86 = scmp.ne.s32.totalorder %s71, %s85
    %p87 = scmp.eq.s32.totalorder %s19, 0
    %p88 = por %p86, %p87
    %s89 = ssub.s32 %s13, %s20
    %p90 = scmp.eq.s32.totalorder %s89, 0
    %s92 = sadd.s32 %s91, 1
    %s93 = scalar_select %p90, %s91, %s92
    %p96 = pneg %p90
    %p97 = scmp.eq.s32.totalorder %s13, 1
    %p98 = por %p96, %p97
    %p99 = scmp.ne.s32.totalorder %s91, %s94
    %p100 = scmp.eq.s32.totalorder %s13, 0
    %p101 = por %p99, %p100
    %p102 = scmp.ne.s32.totalorder %s91, %s94
    %p103 = scmp.eq.s32.totalorder %s18, 1
    %p104 = por %p102, %p103
    %p105 = scmp.ne.s32.totalorder %s94, %s95
    %p106 = scmp.eq.s32.totalorder %s18, 0
    %p107 = por %p105, %p106
    %p108 = scmp.ne.s32.totalorder %s94, %s95
    %p109 = scmp.eq.s32.totalorder %s19, 1
    %p110 = por %p108, %p109
    %p112 = scmp.ne.s32.totalorder %s95, %s111
    %p113 = scmp.eq.s32.totalorder %s19, 0
    %p114 = por %p112, %p113
    %s116 = sadd.s32 %s115, 1
    %p119 = scmp.eq.s32.totalorder %s13, 1
    %p120 = scmp.ne.s32.totalorder %s115, %s117
    %p121 = scmp.eq.s32.totalorder %s13, 0
    %p122 = por %p120, %p121
    %p123 = scmp.ne.s32.totalorder %s115, %s117
    %p124 = scmp.eq.s32.totalorder %s18, 1
    %p125 = por %p123, %p124
    %p126 = scmp.ne.s32.totalorder %s117, %s118
    %p127 = scmp.eq.s32.totalorder %s18, 0
    %p128 = por %p126, %p127
    %p129 = scmp.ne.s32.totalorder %s117, %s118
    %p130 = scmp.eq.s32.totalorder %s19, 1
    %p131 = por %p129, %p130
    %p133 = scmp.ne.s32.totalorder %s118, %s132
    %p134 = scmp.eq.s32.totalorder %s19, 0
    %p135 = por %p133, %p134
    %s137 = sadd.s32 %s136, 1
    %p140 = scmp.eq.s32.totalorder %s13, 1
    %p141 = scmp.ne.s32.totalorder %s136, %s138
    %p142 = scmp.eq.s32.totalorder %s13, 0
    %p143 = por %p141, %p142
    %p144 = scmp.ne.s32.totalorder %s136, %s138
    %p145 = scmp.eq.s32.totalorder %s18, 1
    %p146 = por %p144, %p145
    %p147 = scmp.ne.s32.totalorder %s138, %s139
    %p148 = scmp.eq.s32.totalorder %s18, 0
    %p149 = por %p147, %p148
    %p150 = scmp.ne.s32.totalorder %s138, %s139
    %p151 = scmp.eq.s32.totalorder %s19, 1
    %p152 = por %p150, %p151
    %p154 = scmp.ne.s32.totalorder %s139, %s153
    %p155 = scmp.eq.s32.totalorder %s19, 0
    %p156 = por %p154, %p155
    %s158 = sadd.s32 %s157, 1
    %p161 = scmp.eq.s32.totalorder %s13, 1
    %p162 = scmp.ne.s32.totalorder %s157, %s159
    %p163 = scmp.eq.s32.totalorder %s13, 0
    %p164 = por %p162, %p163
    %p165 = scmp.ne.s32.totalorder %s157, %s159
    %p166 = scmp.eq.s32.totalorder %s18, 1
    %p167 = por %p165, %p166
    %p168 = scmp.ne.s32.totalorder %s159, %s160
    %p169 = scmp.eq.s32.totalorder %s18, 0
    %p170 = por %p168, %p169
    %p171 = scmp.ne.s32.totalorder %s159, %s160
    %p172 = scmp.eq.s32.totalorder %s19, 1
    %p173 = por %p171, %p172
    %p175 = scmp.ne.s32.totalorder %s160, %s174
    %p176 = scmp.eq.s32.totalorder %s19, 0
    %p177 = por %p175, %p176
    %s178 = ssub.s32 %s13, %s20
    %p179 = scmp.eq.s32.totalorder %s178, 0
    %s181 = sadd.s32 %s180, 1
    %s182 = scalar_select %p179, %s180, %s181
    %p185 = pneg %p179
    %p186 = scmp.eq.s32.totalorder %s13, 1
    %p187 = por %p185, %p186
    %p188 = scmp.ne.s32.totalorder %s180, %s183
    %p189 = scmp.eq.s32.totalorder %s13, 0
    %p190 = por %p188, %p189
    %p191 = scmp.ne.s32.totalorder %s180, %s183
    %p192 = scmp.eq.s32.totalorder %s18, 1
    %p193 = por %p191, %p192
    %p194 = scmp.ne.s32.totalorder %s183, %s184
    %p195 = scmp.eq.s32.totalorder %s18, 0
    %p196 = por %p194, %p195
    %p197 = scmp.ne.s32.totalorder %s183, %s184
    %p198 = scmp.eq.s32.totalorder %s19, 1
    %p199 = por %p197, %p198
    %p201 = scmp.ne.s32.totalorder %s184, %s200
    %p202 = scmp.eq.s32.totalorder %s19, 0
    %p203 = por %p201, %p202
    %p204 = scmp.le.s32.totalorder 1, %s13
    %p205 = scmp.lt.s32.totalorder %s13, 3
    %p206 = pnand %p204, %p205
    %p207 = pneg %p206
    // Predicated region
    $region9: #{_forward_core.3} parent=5 // pred_check
      _
    $region10: #{_forward_core.3} parent=5 // pred_check_branch
      %209 = sbr.rel (%p206) target = $region12
    $region11: #{_forward_core.3} parent=5 // pred_region
      %s210 = ssub.s32 %s13, 1
      // Predicated region
      $region13: #{_forward_core.3} parent=11 // pred_check
        %p211 = pneg %p60
      $region14: #{_forward_core.3} parent=11 // pred_check_branch
        %213 = sbr.rel (%p211) target = $region16
      $region15: #{_forward_core.3} parent=11 // pred_region
        _
      $region16: #{_forward_core.3} parent=11 // pred_fallthru
        _
      // Predicated region
      $region17: #{_forward_core.3} parent=11 // pred_check
        %p214 = pneg %p81
      $region18: #{_forward_core.3} parent=11 // pred_check_branch
        %216 = sbr.rel (%p214) target = $region20
      $region19: #{_forward_core.3} parent=11 // pred_region
        _
      $region20: #{_forward_core.3} parent=11 // pred_fallthru
        _
      // Predicated region
      $region21: #{_forward_core.3} parent=11 // pred_check
        %p217 = pneg %p128
      $region22: #{_forward_core.3} parent=11 // pred_check_branch
        %219 = sbr.rel (%p217) target = $region24
      $region23: #{_forward_core.3} parent=11 // pred_region
        _
      $region24: #{_forward_core.3} parent=11 // pred_fallthru
        _
      // Predicated region
      $region25: #{_forward_core.3} parent=11 // pred_check
        %p220 = pneg %p149
      $region26: #{_forward_core.3} parent=11 // pred_check_branch
        %222 = sbr.rel (%p220) target = $region28
      $region27: #{_forward_core.3} parent=11 // pred_region
        _
      $region28: #{_forward_core.3} parent=11 // pred_fallthru
        _
      // Predicated region
      $region29: #{_forward_core.3} parent=11 // pred_check
        %p223 = pneg %p170
      $region30: #{_forward_core.3} parent=11 // pred_check_branch
        %225 = sbr.rel (%p223) target = $region32
      $region31: #{_forward_core.3} parent=11 // pred_region
        _
      $region32: #{_forward_core.3} parent=11 // pred_fallthru
        _
    $region12: #{_forward_core.3} parent=5 // pred_fallthru
      _
    %p226 = scmp.lt.s32.totalorder %s13, 2
    // Predicated region
    $region33: #{_forward_core.3} parent=5 // pred_check
      %p227 = pneg %p226
    $region34: #{_forward_core.3} parent=5 // pred_check_branch
      %229 = sbr.rel (%p227) target = $region36
    $region35: #{_forward_core.3} parent=5 // pred_region
      // Predicated region
      $region37: #{_forward_core.3} parent=35 // pred_check
        %p230 = pneg %p33
      $region38: #{_forward_core.3} parent=35 // pred_check_branch
        %232 = sbr.rel (%p230) target = $region40
      $region39: #{_forward_core.3} parent=35 // pred_region
        %s233 = smul.u32 2, %s13
        %p234 = scmp.lt.s32.totalorder %s233, 3
        %s235 = scalar_select %p234, %s233, 3
        %s236 = smul.addr %s235, 8
        %s237 = scalar_lea.vmem %s0, %s236
        %s238 = smul.u32 2, %s13
      $region40: #{_forward_core.3} parent=35 // pred_fallthru
        _
      // Predicated region
      $region41: #{_forward_core.3} parent=35 // pred_check
        %p239 = pneg %p101
      $region42: #{_forward_core.3} parent=35 // pred_check_branch
        %241 = sbr.rel (%p239) target = $region44
      $region43: #{_forward_core.3} parent=35 // pred_region
        %s242 = smul.u32 2, %s13
        %p243 = scmp.lt.s32.totalorder %s242, 3
        %s244 = scalar_select %p243, %s242, 3
        %s245 = smul.addr %s244, 8
        %s246 = scalar_lea.vmem %s3, %s245
        %s247 = smul.u32 2, %s13
      $region44: #{_forward_core.3} parent=35 // pred_fallthru
        _
    $region36: #{_forward_core.3} parent=5 // pred_fallthru
      _
    %p248 = scmp.le.s32.totalorder 1, %s13
    %p249 = scmp.lt.s32.totalorder %s13, 3
    %p250 = pnand %p248, %p249
    %p251 = pneg %p250
    // Predicated region
    $region45: #{_forward_core.3} parent=5 // pred_check
      _
    $region46: #{_forward_core.3} parent=5 // pred_check_branch
      %253 = sbr.rel (%p250) target = $region48
    $region47: #{_forward_core.3} parent=5 // pred_region
      %s254 = ssub.s32 %s13, 1
      %s255 = smul.u32 2, %s18
      %p256 = scmp.lt.s32.totalorder %s255, 3
      %s257 = scalar_select %p256, %s255, 3
      %s258 = smul.addr %s257, 8
      %s259 = scalar_lea.vmem %s0, %s258
      %p260 = pneg %p39
      %p261 = pneg %p36
      %p262 = pneg %p60
      %p263 = pneg %p57
      %p264 = pneg %p81
      %p265 = pneg %p78
      %s266 = smul.u32 2, %s18
      %p267 = scmp.lt.s32.totalorder %s266, 3
      %s268 = scalar_select %p267, %s266, 3
      %s269 = smul.addr %s268, 8
      %s270 = scalar_lea.vmem %s3, %s269
      %p271 = pneg %p107
      %p272 = pneg %p104
      %p273 = pneg %p128
      %p274 = pneg %p125
      %p275 = pneg %p149
      %p276 = pneg %p146
      %p277 = pneg %p170
      %p278 = pneg %p167
      %p279 = pneg %p196
      %p280 = pneg %p193
      %s281 = smul.u32 2, %s18
      %p282 = scmp.lt.s32.totalorder %s281, 3
      %s283 = scalar_select %p282, %s281, 3
      %s284 = smul.addr %s283, 8
      %s285 = scalar_lea.vmem %s7, %s284
      %s286 = smul.u32 2, %s18
      %p287 = scmp.lt.s32.totalorder %s286, 3
      %s288 = scalar_select %p287, %s286, 3
      %s289 = smul.addr %s288, 8
      %s290 = scalar_lea.vmem %s0, %s289
      %s291 = smul.u32 2, %s18
      %s292 = smul.u32 2, %s18
      %p293 = scmp.lt.s32.totalorder %s292, 3
      %s294 = scalar_select %p293, %s292, 3
      %s295 = smul.addr %s294, 8
      %s296 = scalar_lea.vmem %s3, %s295
      %s297 = smul.u32 2, %s18
      %s298 = smul.u32 2, %s18
      %p299 = scmp.lt.s32.totalorder %s298, 3
      %s300 = scalar_select %p299, %s298, 3
      %s301 = smul.addr %s300, 8
      %s302 = scalar_lea.vmem %s7, %s301
      %s303 = smul.u32 2, %s18
      %v304 = vld [vmem:[%s290] sm:$0xff]
      %v305 = vld [vmem:[%s290 + $0x8] sm:$0xff]
      %v306 = vld [vmem:[%s1] sm:$0xff]
      %v307 = vld [vmem:[%s1 + $0x8] sm:$0xff]
      %v308 = vld [vmem:[%s1 + $0x10] sm:$0xff]
      %v309 = vld [vmem:[%s1 + $0x18] sm:$0xff]
      %v310 = vld [vmem:[%s2] sm:$0x1]
      %v312 = vlaneseq
      %v313 = vshrl.u32 %v312, 7
      %v314 = vsub.s32 0, %v313
      %v315 = vrot.slane %v310, %v314
      %vm317 = vcmask 261120
      %v319 = vsel %vm317, %v304, 0
      %v322 = vsel %vm317, %v305, 0
      %324 = vmatprep.subr.mxu0 0.0
      %325 = vmatpush1.msra.mxu0 %v306
      %326 = vmatprep.subr.mxu0 0.0
      %327 = vmatpush1.msra.mxu0 %v307
      %328 = vmatprep.subr.mxu0 0.0
      %329 = vmatpush1.msra.mxu0 %v308
      %330 = vmatprep.subr.mxu0 0.0
      %331 = vmatpush1.msra.mxu0 %v309
      %332 = vmatprep.subr.mxu0 0.0
      %333 = vmatpush1.msra.mxu0 0.0
      %334 = vmatprep.subr.mxu0 0.0
      %335 = vmatpush1.msra.mxu0 0.0
      %336 = vmatprep.subr.mxu0 0.0
      %337 = vmatpush1.msra.mxu0 0.0
      %338 = vmatprep.subr.mxu0 0.0
      %339 = vmatpush1.msra.mxu0 0.0
      %340 = vmatprep.subr.mxu0 0.0
      %341 = vmatpush1.msra.mxu0 0.0
      %342 = vmatprep.subr.mxu0 0.0
      %343 = vmatpush1.msra.mxu0 0.0
      %344 = vmatprep.subr.mxu0 0.0
      %345 = vmatpush1.msra.mxu0 0.0
      %346 = vmatprep.subr.mxu0 0.0
      %347 = vmatpush1.msra.mxu0 0.0
      %348 = vmatprep.subr.mxu0 0.0
      %349 = vmatpush1.msra.mxu0 0.0
      %350 = vmatprep.subr.mxu0 0.0
      %351 = vmatpush1.msra.mxu0 0.0
      %352 = vmatprep.subr.mxu0 0.0
      %353 = vmatpush1.msra.mxu0 0.0
      %354 = vmatprep.subr.mxu0 0.0
      %355 = vmatpush1.msra.mxu0 0.0
      %356 = vmatprep.subr.mxu0 0.0
      %357 = vmatpush1.msra.mxu0 0.0
      %358 = vmatprep.subr.mxu0 0.0
      %359 = vmatpush1.msra.mxu0 0.0
      %360 = vmatprep.subr.mxu0 0.0
      %361 = vmatpush1.msra.mxu0 0.0
      %362 = vmatprep.subr.mxu0 0.0
      %363 = vmatpush1.msra.mxu0 0.0
      %364 = vmatprep.subr.mxu0 0.0
      %365 = vmatpush1.msra.mxu0 0.0
      %366 = vmatprep.subr.mxu0 0.0
      %367 = vmatpush1.msra.mxu0 0.0
      %368 = vmatprep.subr.mxu0 0.0
      %369 = vmatpush1.msra.mxu0 0.0
      %370 = vmatprep.subr.mxu0 0.0
      %371 = vmatpush1.msra.mxu0 0.0
      %372 = vmatprep.subr.mxu0 0.0
      %373 = vmatpush1.msra.mxu0 0.0
      %374 = vmatprep.subr.mxu0 0.0
      %375 = vmatpush1.msra.mxu0 0.0
      %376 = vmatprep.subr.mxu0 0.0
      %377 = vmatpush1.msra.mxu0 0.0
      %378 = vmatprep.subr.mxu0 0.0
      %379 = vmatpush1.msra.mxu0 0.0
      %380 = vmatprep.subr.mxu0 0.0
      %381 = vmatpush1.msra.mxu0 0.0
      %382 = vmatprep.subr.mxu0 0.0
      %383 = vmatpush1.msra.mxu0 0.0
      %384 = vmatprep.subr.mxu0 0.0
      %385 = vmatpush1.msra.mxu0 0.0
      %386 = vmatprep.subr.mxu0 0.0
      %387 = vmatpush1.msra.mxu0 0.0
      %388 = vmatprep.mubr.f32.mxu0 0.0
      %389 = vmatmul.mubr.f32.gmra.mrb[0].mxu0 %v319
      %v390 = vpop.f32.mrb[0].mxu0
      %v391 = vadd.f32 %v315, %v390
      %v392 = vpop.f32.mrb[0].mxu0
      %393 = vmatprep.mubr.f32.mxu0 0.0
      %394 = vmatmul.mubr.f32.gmra.mrb[0].mxu0 %v322
      %v395 = vpop.f32.mrb[0].mxu0
      %v396 = vadd.f32 %v315, %v395
      %v397 = vpop.f32.mrb[0].mxu0
      %398 = vdwg.mxu0
      %v399 = vtanh.pop %v391
      %v400 = vtanh.pop %v396
      %v401 = vld [vmem:[%s4] sm:$0xff]
      %v402 = vld [vmem:[%s4 + $0x8] sm:$0xff]
      %v403 = vld [vmem:[%s4 + $0x10] sm:$0xff]
      %v404 = vld [vmem:[%s4 + $0x18] sm:$0xff]
      %v405 = vld [vmem:[%s6] sm:$0x1]
      %v407 = vlaneseq
      %v408 = vshrl.u32 %v407, 7
      %v409 = vsub.s32 0, %v408
      %v410 = vrot.slane %v405, %v409
      %v413 = vsel %vm317, %v399, 0
      %v416 = vsel %vm317, %v400, 0
      %418 = vmatprep.subr.mxu0 0.0
      %419 = vmatpush1.msra.mxu0 %v401
      %420 = vmatprep.subr.mxu0 0.0
      %421 = vmatpush1.msra.mxu0 %v402
      %422 = vmatprep.subr.mxu0 0.0
      %423 = vmatpush1.msra.mxu0 %v403
      %424 = vmatprep.subr.mxu0 0.0
      %425 = vmatpush1.msra.mxu0 %v404
      %426 = vmatprep.subr.mxu0 0.0
      %427 = vmatpush1.msra.mxu0 0.0
      %428 = vmatprep.subr.mxu0 0.0
      %429 = vmatpush1.msra.mxu0 0.0
      %430 = vmatprep.subr.mxu0 0.0
      %431 = vmatpush1.msra.mxu0 0.0
      %432 = vmatprep.subr.mxu0 0.0
      %433 = vmatpush1.msra.mxu0 0.0
      %434 = vmatprep.subr.mxu0 0.0
      %435 = vmatpush1.msra.mxu0 0.0
      %436 = vmatprep.subr.mxu0 0.0
      %437 = vmatpush1.msra.mxu0 0.0
      %438 = vmatprep.subr.mxu0 0.0
      %439 = vmatpush1.msra.mxu0 0.0
      %440 = vmatprep.subr.mxu0 0.0
      %441 = vmatpush1.msra.mxu0 0.0
      %442 = vmatprep.subr.mxu0 0.0
      %443 = vmatpush1.msra.mxu0 0.0
      %444 = vmatprep.subr.mxu0 0.0
      %445 = vmatpush1.msra.mxu0 0.0
      %446 = vmatprep.subr.mxu0 0.0
      %447 = vmatpush1.msra.mxu0 0.0
      %448 = vmatprep.subr.mxu0 0.0
      %449 = vmatpush1.msra.mxu0 0.0
      %450 = vmatprep.subr.mxu0 0.0
      %451 = vmatpush1.msra.mxu0 0.0
      %452 = vmatprep.subr.mxu0 0.0
      %453 = vmatpush1.msra.mxu0 0.0
      %454 = vmatprep.subr.mxu0 0.0
      %455 = vmatpush1.msra.mxu0 0.0
      %456 = vmatprep.subr.mxu0 0.0
      %457 = vmatpush1.msra.mxu0 0.0
      %458 = vmatprep.subr.mxu0 0.0
      %459 = vmatpush1.msra.mxu0 0.0
      %460 = vmatprep.subr.mxu0 0.0
      %461 = vmatpush1.msra.mxu0 0.0
      %462 = vmatprep.subr.mxu0 0.0
      %463 = vmatpush1.msra.mxu0 0.0
      %464 = vmatprep.subr.mxu0 0.0
      %465 = vmatpush1.msra.mxu0 0.0
      %466 = vmatprep.subr.mxu0 0.0
      %467 = vmatpush1.msra.mxu0 0.0
      %468 = vmatprep.subr.mxu0 0.0
      %469 = vmatpush1.msra.mxu0 0.0
      %470 = vmatprep.subr.mxu0 0.0
      %471 = vmatpush1.msra.mxu0 0.0
      %472 = vmatprep.subr.mxu0 0.0
      %473 = vmatpush1.msra.mxu0 0.0
      %474 = vmatprep.subr.mxu0 0.0
      %475 = vmatpush1.msra.mxu0 0.0
      %476 = vmatprep.subr.mxu0 0.0
      %477 = vmatpush1.msra.mxu0 0.0
      %478 = vmatprep.subr.mxu0 0.0
      %479 = vmatpush1.msra.mxu0 0.0
      %480 = vmatprep.subr.mxu0 0.0
      %481 = vmatpush1.msra.mxu0 0.0
      %482 = vmatprep.mubr.f32.mxu0 0.0
      %483 = vmatmul.mubr.f32.gmra.mrb[0].mxu0 %v413
      %v484 = vpop.f32.mrb[0].mxu0
      %v485 = vadd.f32 %v410, %v484
      %v486 = vpop.f32.mrb[0].mxu0
      %487 = vmatprep.mubr.f32.mxu0 0.0
      %488 = vmatmul.mubr.f32.gmra.mrb[0].mxu0 %v416
      %v489 = vpop.f32.mrb[0].mxu0
      %v490 = vadd.f32 %v410, %v489
      %v491 = vpop.f32.mrb[0].mxu0
      %492 = vdwg.mxu0
      %v493 = vld [vmem:[%s296] sm:$0xff]
      %v494 = vld [vmem:[%s296 + $0x8] sm:$0xff]
      %v495 = vld [vmem:[%s5] sm:$0xff]
      %v496 = vld [vmem:[%s5 + $0x8] sm:$0xff]
      %v497 = vld [vmem:[%s5 + $0x10] sm:$0xff]
      %v498 = vld [vmem:[%s5 + $0x18] sm:$0xff]
      %v500 = vsel %vm317, %v493, 0
      %v503 = vsel %vm317, %v494, 0
      %505 = vmatprep.subr.mxu0 0.0
      %506 = vmatpush1.msra.mxu0 %v495
      %507 = vmatprep.subr.mxu0 0.0
      %508 = vmatpush1.msra.mxu0 %v496
      %509 = vmatprep.subr.mxu0 0.0
      %510 = vmatpush1.msra.mxu0 %v497
      %511 = vmatprep.subr.mxu0 0.0
      %512 = vmatpush1.msra.mxu0 %v498
      %513 = vmatprep.subr.mxu0 0.0
      %514 = vmatpush1.msra.mxu0 0.0
      %515 = vmatprep.subr.mxu0 0.0
      %516 = vmatpush1.msra.mxu0 0.0
      %517 = vmatprep.subr.mxu0 0.0
      %518 = vmatpush1.msra.mxu0 0.0
      %519 = vmatprep.subr.mxu0 0.0
      %520 = vmatpush1.msra.mxu0 0.0
      %521 = vmatprep.subr.mxu0 0.0
      %522 = vmatpush1.msra.mxu0 0.0
      %523 = vmatprep.subr.mxu0 0.0
      %524 = vmatpush1.msra.mxu0 0.0
      %525 = vmatprep.subr.mxu0 0.0
      %526 = vmatpush1.msra.mxu0 0.0
      %527 = vmatprep.subr.mxu0 0.0
      %528 = vmatpush1.msra.mxu0 0.0
      %529 = vmatprep.subr.mxu0 0.0
      %530 = vmatpush1.msra.mxu0 0.0
      %531 = vmatprep.subr.mxu0 0.0
      %532 = vmatpush1.msra.mxu0 0.0
      %533 = vmatprep.subr.mxu0 0.0
      %534 = vmatpush1.msra.mxu0 0.0
      %535 = vmatprep.subr.mxu0 0.0
      %536 = vmatpush1.msra.mxu0 0.0
      %537 = vmatprep.subr.mxu0 0.0
      %538 = vmatpush1.msra.mxu0 0.0
      %539 = vmatprep.subr.mxu0 0.0
      %540 = vmatpush1.msra.mxu0 0.0
      %541 = vmatprep.subr.mxu0 0.0
      %542 = vmatpush1.msra.mxu0 0.0
      %543 = vmatprep.subr.mxu0 0.0
      %544 = vmatpush1.msra.mxu0 0.0
      %545 = vmatprep.subr.mxu0 0.0
      %546 = vmatpush1.msra.mxu0 0.0
      %547 = vmatprep.subr.mxu0 0.0
      %548 = vmatpush1.msra.mxu0 0.0
      %549 = vmatprep.subr.mxu0 0.0
      %550 = vmatpush1.msra.mxu0 0.0
      %551 = vmatprep.subr.mxu0 0.0
      %552 = vmatpush1.msra.mxu0 0.0
      %553 = vmatprep.subr.mxu0 0.0
      %554 = vmatpush1.msra.mxu0 0.0
      %555 = vmatprep.subr.mxu0 0.0
      %556 = vmatpush1.msra.mxu0 0.0
      %557 = vmatprep.subr.mxu0 0.0
      %558 = vmatpush1.msra.mxu0 0.0
      %559 = vmatprep.subr.mxu0 0.0
      %560 = vmatpush1.msra.mxu0 0.0
      %561 = vmatprep.subr.mxu0 0.0
      %562 = vmatpush1.msra.mxu0 0.0
      %563 = vmatprep.subr.mxu0 0.0
      %564 = vmatpush1.msra.mxu0 0.0
      %565 = vmatprep.subr.mxu0 0.0
      %566 = vmatpush1.msra.mxu0 0.0
      %567 = vmatprep.subr.mxu0 0.0
      %568 = vmatpush1.msra.mxu0 0.0
      %569 = vmatprep.mubr.f32.mxu0 0.0
      %570 = vmatmul.mubr.f32.gmra.mrb[0].mxu0 %v500
      %v571 = vpop.f32.mrb[0].mxu0
      %v572 = vadd.f32 0.0, %v571
      %v573 = vpop.f32.mrb[0].mxu0
      %574 = vmatprep.mubr.f32.mxu0 0.0
      %575 = vmatmul.mubr.f32.gmra.mrb[0].mxu0 %v503
      %v576 = vpop.f32.mrb[0].mxu0
      %v577 = vadd.f32 0.0, %v576
      %v578 = vpop.f32.mrb[0].mxu0
      %579 = vdwg.mxu0
      %v580 = vadd.f32 %v485, %v572
      %v581 = vadd.f32 %v490, %v577
      %582 = vst [vmem:[%s302] sm:$0xff] %v580
      %583 = vst [vmem:[%s302 + $0x8] sm:$0xff] %v581
      %s584 = smul.u32 2, %s18
      %p585 = scmp.lt.s32.totalorder %s584, 3
      %s586 = scalar_select %p585, %s584, 3
      %s587 = smul.addr %s586, 8
      %s588 = scalar_lea.vmem %s7, %s587
      // Predicated region
      $region49: #{_forward_core.3} parent=47 // pred_check
        %p589 = pneg %p193
      $region50: #{_forward_core.3} parent=47 // pred_check_branch
        %591 = sbr.rel (%p589) target = $region52
      $region51: #{_forward_core.3} parent=47 // pred_region
        %s592 = smul.u32 2, %s18
      $region52: #{_forward_core.3} parent=47 // pred_fallthru
        _
    $region48: #{_forward_core.3} parent=5 // pred_fallthru
      _
    %p593 = scmp.le.s32.totalorder 2, %s13
    // Predicated region
    $region53: #{_forward_core.3} parent=5 // pred_check
      %p594 = pneg %p593
    $region54: #{_forward_core.3} parent=5 // pred_check_branch
      %596 = sbr.rel (%p594) target = $region56
    $region55: #{_forward_core.3} parent=5 // pred_region
      %s597 = ssub.s32 %s13, 2
      // Predicated region
      $region57: #{_forward_core.3} parent=55 // pred_check
        %p598 = pneg %p199
      $region58: #{_forward_core.3} parent=55 // pred_check_branch
        %600 = sbr.rel (%p598) target = $region60
      $region59: #{_forward_core.3} parent=55 // pred_region
        %s601 = smul.u32 2, %s19
        %p602 = scmp.lt.s32.totalorder %s601, 3
        %s603 = scalar_select %p602, %s601, 3
        %s604 = smul.addr %s603, 8
        %s605 = scalar_lea.vmem %s7, %s604
      $region60: #{_forward_core.3} parent=55 // pred_fallthru
        _
    $region56: #{_forward_core.3} parent=5 // pred_fallthru
      _
  $region6: #{_forward_core.3} parent=0 // loop_footer
    %s17 = sadd.s32 1, %s13
  $region7: #{_forward_core.3} parent=0 // loop_footer_branch
    %12 = sbr.rel target = $region3
  $region8: #{_forward_core.3} parent=0 // loop_exit
    _

// kernel: _forward_core.2
$region0: #{_forward_core.2}
  #allocation0 [shape = 'u32[]', space=smem, size = 0x4, offset = 0x4, fixed_abs, tag = 'smem constant byte address 0x4 - core index']
  #allocation1 [shape = 'u32[144,128]{1,0:T(1,128)}', space=vmem, size = 0x12000, scoped, tag = 'internal scratch']
  #allocation2 [shape = 'f32[2,4,32]{2,1,0:T(4,128)}', space=vmem, size = 0x1000, scoped, tag = 'scratch operand']
  #allocation3 [shape = 'f32[2,4]{1,0:T(2,128)}', space=vmem, size = 0x400, scoped, tag = 'scratch operand']
  #allocation4 [shape = 'f32[2,32]{1,0:T(2,128)}', space=vmem, size = 0x400, scoped, tag = 'scratch operand']
  #allocation5 [shape = 'f32[2,1]{1,0:T(2,128)}', space=vmem, size = 0x400, scoped, tag = 'scratch operand']
  #allocation6 [shape = 'f32[2,4]{1,0:T(2,128)}', space=vmem, size = 0x400, scoped, tag = 'scratch operand']
  #allocation7 [shape = 'f32[2,4]{1,0:T(2,128)}', space=vmem, size = 0x400, scoped, tag = 'scratch operand']
  #allocation8 [shape = 'f32[1,1]{1,0:T(1,128)}', space=vmem, size = 0x200, scoped, tag = 'scratch operand']
  #allocation9 [shape = 'f32[1,1]{1,0:T(1,128)}', space=vmem, size = 0x200, scoped, tag = 'scratch operand']
  #allocation10 [shape = 'f32[1,1]{1,0:T(1,128)S(1)}', space=vmem, size = 0x200, scoped, tag = 'scoped memory for _forward_core.2']
  %s0 = inlined_call_operand.vmem [shape: s32[2,16], index: 0, kind: input, shape index: {}]
  %s1 = inlined_call_operand.vmem [shape: s32[2,128], index: 1, kind: input, shape index: {}]
  %s2 = inlined_call_operand.vmem [shape: f32[2,16,32], index: 2, kind: input, shape index: {}]
  %s3 = inlined_call_operand.vmem [shape: f32[1,32], index: 3, kind: input, shape index: {}]
  %s4 = inlined_call_operand.vmem [shape: f32[32,32], index: 4, kind: input, shape index: {}]
  %s5 = inlined_call_operand.vmem [shape: f32[1,32], index: 5, kind: input, shape index: {}]
  %s6 = inlined_call_operand.vmem [shape: f32[32,16], index: 6, kind: input, shape index: {}]
  %s7 = inlined_call_operand.vmem [shape: f32[1,16], index: 7, kind: input, shape index: {}]
  %s8 = inlined_call_operand.vmem [shape: f32[1,16], index: 8, kind: input, shape index: {}]
  %s9 = inlined_call_operand.<no memory space> [shape: f32[1,1], index: 9, kind: input, shape index: {}]
  %s10 = inlined_call_operand.hbm [shape: f32[3,2,128], index: 10, kind: output, shape index: {0}]
  %s11 = inlined_call_operand.vmem [shape: f32[2,128], index: 11, kind: output, shape index: {1}]
  %s12 = inlined_call_operand.hbm [shape: f32[1,128], index: 12, kind: output, shape index: {2}]
  %s13 = inlined_call_operand.vmem [shape: f32[2,16,32], index: 13, kind: output, shape index: {3}]
  %14 = xla_tuple %s10, %s11, %s12, %s13
  %s15 = sld [smem:[#allocation0]]
  $region109: #{_forward_core.2} parent=0
    _
  %s17 = ssub.s32 1, %s15
  %s18 = scalar_select 0, %s17, %s15
  %v19 = vstv %s9
  %20 = vst [vmem:[#allocation10] sm:$0x1] %v19
  $region1: #{_forward_core.2} parent=0
    #allocation11 [shape = 'u8[3072]{0}', space=vmem, size = 0xc00, scoped, tag = 'output window, operand 0, single buffered']
    #allocation12 [shape = 's32[2]{0}', space=sflag, size = 0x8, scoped, tag = 'scoped memory for _forward_core.2']
    #allocation13 [shape = 'u8[512]{0}', space=vmem, size = 0x400, scoped, tag = 'output window, operand 2, single buffered']
    #allocation14 [shape = 's32[1]{0}', space=sflag, size = 0x4, scoped, tag = 'scoped memory for _forward_core.2']
    %21 = vsyncpa [#allocation12], 0
    %22 = vsyncpa [#allocation14], 0
    loop: start=0, step=1, limit=5
    $region2: #{_forward_core.2} parent=1 // loop_pre_header
      _
    $region3: #{_forward_core.2} parent=1 // loop_header
      %s24 = sphi 0, %s28
      %p25 = scmp.ge.s32.totalorder %s24, 5
      %s32 = sphi 0, %s32
      %s34 = sphi 0, %s32
      %s35 = sphi 0, %s34
      %s49 = sphi 0, %s35
      %s53 = sphi 0, %s53
      %s55 = sphi 0, %s53
      %s56 = sphi 0, %s55
      %s70 = sphi 0, %s56
      %s74 = sphi 0, %s74
      %s76 = sphi 0, %s74
      %s77 = sphi 0, %s76
      %s91 = sphi 0, %s77
      %s95 = sphi 0, %s95
      %s97 = sphi 0, %s95
      %s98 = sphi 0, %s97
      %s112 = sphi 0, %s98
      %s116 = sphi 0, %s116
      %s118 = sphi 0, %s116
      %s119 = sphi 0, %s118
      %s133 = sphi 0, %s119
      %s137 = sphi 0, %s137
      %s139 = sphi 0, %s137
      %s140 = sphi 0, %s139
      %s154 = sphi 0, %s140
      %s158 = sphi 0, %s158
      %s160 = sphi 0, %s158
      %s161 = sphi 0, %s160
      %s175 = sphi 0, %s161
      %s179 = sphi 0, %s179
      %s181 = sphi 0, %s179
      %s182 = sphi 0, %s181
      %s196 = sphi 0, %s182
      %s200 = sphi 0, %s200
      %s202 = sphi 0, %s200
      %s203 = sphi 0, %s202
      %s217 = sphi 0, %s203
      %s221 = sphi 0, %s221
      %s223 = sphi 0, %s221
      %s224 = sphi 0, %s223
      %s238 = sphi 0, %s224
      %s242 = sphi 0, %s242
      %s244 = sphi 0, %s242
      %s245 = sphi 0, %s244
      %s259 = sphi 0, %s245
      %s263 = sphi 0, %s263
      %s265 = sphi 0, %s263
      %s266 = sphi 0, %s265
      %s280 = sphi 0, %s266
      %s284 = sphi 0, %s284
      %s286 = sphi 0, %s284
      %s287 = sphi 0, %s286
      %s301 = sphi 0, %s287
      %s305 = sphi 0, %s305
      %s307 = sphi 0, %s305
      %s308 = sphi 0, %s307
      %s322 = sphi 0, %s308
    $region4: #{_forward_core.2} parent=1 // loop_header_branch
      %27 = sbr.rel (%p25) target = $region8
    $region5: #{_forward_core.2} parent=1 // loop_body
      %s29 = ssub.s32 %s24, 1
      %s30 = ssub.s32 %s24, 2
      %s31 = sadd.s32 %s24, 1
      %s33 = sadd.s32 %s32, 1
      %p36 = scmp.eq.s32.totalorder %s24, 2
      %p37 = scmp.ne.s32.totalorder %s32, %s34
      %p38 = scmp.eq.s32.totalorder %s24, 0
      %p39 = por %p37, %p38
      %p40 = scmp.ne.s32.totalorder %s32, %s34
      %p41 = scmp.eq.s32.totalorder %s29, 2
      %p42 = por %p40, %p41
      %p43 = scmp.ne.s32.totalorder %s34, %s35
      %p44 = scmp.eq.s32.totalorder %s29, 0
      %p45 = por %p43, %p44
      %p46 = scmp.ne.s32.totalorder %s34, %s35
      %p47 = scmp.eq.s32.totalorder %s30, 2
      %p48 = por %p46, %p47
      %p50 = scmp.ne.s32.totalorder %s35, %s49
      %p51 = scmp.eq.s32.totalorder %s30, 0
      %p52 = por %p50, %p51
      %s54 = sadd.s32 %s53, 1
      %p57 = scmp.eq.s32.totalorder %s24, 2
      %p58 = scmp.ne.s32.totalorder %s53, %s55
      %p59 = scmp.eq.s32.totalorder %s24, 0
      %p60 = por %p58, %p59
      %p61 = scmp.ne.s32.totalorder %s53, %s55
      %p62 = scmp.eq.s32.totalorder %s29, 2
      %p63 = por %p61, %p62
      %p64 = scmp.ne.s32.totalorder %s55, %s56
      %p65 = scmp.eq.s32.totalorder %s29, 0
      %p66 = por %p64, %p65
      %p67 = scmp.ne.s32.totalorder %s55, %s56
      %p68 = scmp.eq.s32.totalorder %s30, 2
      %p69 = por %p67, %p68
      %p71 = scmp.ne.s32.totalorder %s56, %s70
      %p72 = scmp.eq.s32.totalorder %s30, 0
      %p73 = por %p71, %p72
      %s75 = sadd.s32 %s74, 1
      %p78 = scmp.eq.s32.totalorder %s24, 2
      %p79 = scmp.ne.s32.totalorder %s74, %s76
      %p80 = scmp.eq.s32.totalorder %s24, 0
      %p81 = por %p79, %p80
      %p82 = scmp.ne.s32.totalorder %s74, %s76
      %p83 = scmp.eq.s32.totalorder %s29, 2
      %p84 = por %p82, %p83
      %p85 = scmp.ne.s32.totalorder %s76, %s77
      %p86 = scmp.eq.s32.totalorder %s29, 0
      %p87 = por %p85, %p86
      %p88 = scmp.ne.s32.totalorder %s76, %s77
      %p89 = scmp.eq.s32.totalorder %s30, 2
      %p90 = por %p88, %p89
      %p92 = scmp.ne.s32.totalorder %s77, %s91
      %p93 = scmp.eq.s32.totalorder %s30, 0
      %p94 = por %p92, %p93
      %s96 = sadd.s32 %s95, 1
      %p99 = scmp.eq.s32.totalorder %s24, 2
      %p100 = scmp.ne.s32.totalorder %s95, %s97
      %p101 = scmp.eq.s32.totalorder %s24, 0
      %p102 = por %p100, %p101
      %p103 = scmp.ne.s32.totalorder %s95, %s97
      %p104 = scmp.eq.s32.totalorder %s29, 2
      %p105 = por %p103, %p104
      %p106 = scmp.ne.s32.totalorder %s97, %s98
      %p107 = scmp.eq.s32.totalorder %s29, 0
      %p108 = por %p106, %p107
      %p109 = scmp.ne.s32.totalorder %s97, %s98
      %p110 = scmp.eq.s32.totalorder %s30, 2
      %p111 = por %p109, %p110
      %p113 = scmp.ne.s32.totalorder %s98, %s112
      %p114 = scmp.eq.s32.totalorder %s30, 0
      %p115 = por %p113, %p114
      %s117 = sadd.s32 %s116, 1
      %p120 = scmp.eq.s32.totalorder %s24, 2
      %p121 = scmp.ne.s32.totalorder %s116, %s118
      %p122 = scmp.eq.s32.totalorder %s24, 0
      %p123 = por %p121, %p122
      %p124 = scmp.ne.s32.totalorder %s116, %s118
      %p125 = scmp.eq.s32.totalorder %s29, 2
      %p126 = por %p124, %p125
      %p127 = scmp.ne.s32.totalorder %s118, %s119
      %p128 = scmp.eq.s32.totalorder %s29, 0
      %p129 = por %p127, %p128
      %p130 = scmp.ne.s32.totalorder %s118, %s119
      %p131 = scmp.eq.s32.totalorder %s30, 2
      %p132 = por %p130, %p131
      %p134 = scmp.ne.s32.totalorder %s119, %s133
      %p135 = scmp.eq.s32.totalorder %s30, 0
      %p136 = por %p134, %p135
      %s138 = sadd.s32 %s137, 1
      %p141 = scmp.eq.s32.totalorder %s24, 2
      %p142 = scmp.ne.s32.totalorder %s137, %s139
      %p143 = scmp.eq.s32.totalorder %s24, 0
      %p144 = por %p142, %p143
      %p145 = scmp.ne.s32.totalorder %s137, %s139
      %p146 = scmp.eq.s32.totalorder %s29, 2
      %p147 = por %p145, %p146
      %p148 = scmp.ne.s32.totalorder %s139, %s140
      %p149 = scmp.eq.s32.totalorder %s29, 0
      %p150 = por %p148, %p149
      %p151 = scmp.ne.s32.totalorder %s139, %s140
      %p152 = scmp.eq.s32.totalorder %s30, 2
      %p153 = por %p151, %p152
      %p155 = scmp.ne.s32.totalorder %s140, %s154
      %p156 = scmp.eq.s32.totalorder %s30, 0
      %p157 = por %p155, %p156
      %s159 = sadd.s32 %s158, 1
      %p162 = scmp.eq.s32.totalorder %s24, 2
      %p163 = scmp.ne.s32.totalorder %s158, %s160
      %p164 = scmp.eq.s32.totalorder %s24, 0
      %p165 = por %p163, %p164
      %p166 = scmp.ne.s32.totalorder %s158, %s160
      %p167 = scmp.eq.s32.totalorder %s29, 2
      %p168 = por %p166, %p167
      %p169 = scmp.ne.s32.totalorder %s160, %s161
      %p170 = scmp.eq.s32.totalorder %s29, 0
      %p171 = por %p169, %p170
      %p172 = scmp.ne.s32.totalorder %s160, %s161
      %p173 = scmp.eq.s32.totalorder %s30, 2
      %p174 = por %p172, %p173
      %p176 = scmp.ne.s32.totalorder %s161, %s175
      %p177 = scmp.eq.s32.totalorder %s30, 0
      %p178 = por %p176, %p177
      %s180 = sadd.s32 %s179, 1
      %p183 = scmp.eq.s32.totalorder %s24, 2
      %p184 = scmp.ne.s32.totalorder %s179, %s181
      %p185 = scmp.eq.s32.totalorder %s24, 0
      %p186 = por %p184, %p185
      %p187 = scmp.ne.s32.totalorder %s179, %s181
      %p188 = scmp.eq.s32.totalorder %s29, 2
      %p189 = por %p187, %p188
      %p190 = scmp.ne.s32.totalorder %s181, %s182
      %p191 = scmp.eq.s32.totalorder %s29, 0
      %p192 = por %p190, %p191
      %p193 = scmp.ne.s32.totalorder %s181, %s182
      %p194 = scmp.eq.s32.totalorder %s30, 2
      %p195 = por %p193, %p194
      %p197 = scmp.ne.s32.totalorder %s182, %s196
      %p198 = scmp.eq.s32.totalorder %s30, 0
      %p199 = por %p197, %p198
      %s201 = sadd.s32 %s200, 1
      %p204 = scmp.eq.s32.totalorder %s24, 2
      %p205 = scmp.ne.s32.totalorder %s200, %s202
      %p206 = scmp.eq.s32.totalorder %s24, 0
      %p207 = por %p205, %p206
      %p208 = scmp.ne.s32.totalorder %s200, %s202
      %p209 = scmp.eq.s32.totalorder %s29, 2
      %p210 = por %p208, %p209
      %p211 = scmp.ne.s32.totalorder %s202, %s203
      %p212 = scmp.eq.s32.totalorder %s29, 0
      %p213 = por %p211, %p212
      %p214 = scmp.ne.s32.totalorder %s202, %s203
      %p215 = scmp.eq.s32.totalorder %s30, 2
      %p216 = por %p214, %p215
      %p218 = scmp.ne.s32.totalorder %s203, %s217
      %p219 = scmp.eq.s32.totalorder %s30, 0
      %p220 = por %p218, %p219
      %s222 = sadd.s32 %s221, 1
      %p225 = scmp.eq.s32.totalorder %s24, 2
      %p226 = scmp.ne.s32.totalorder %s221, %s223
      %p227 = scmp.eq.s32.totalorder %s24, 0
      %p228 = por %p226, %p227
      %p229 = scmp.ne.s32.totalorder %s221, %s223
      %p230 = scmp.eq.s32.totalorder %s29, 2
      %p231 = por %p229, %p230
      %p232 = scmp.ne.s32.totalorder %s223, %s224
      %p233 = scmp.eq.s32.totalorder %s29, 0
      %p234 = por %p232, %p233
      %p235 = scmp.ne.s32.totalorder %s223, %s224
      %p236 = scmp.eq.s32.totalorder %s30, 2
      %p237 = por %p235, %p236
      %p239 = scmp.ne.s32.totalorder %s224, %s238
      %p240 = scmp.eq.s32.totalorder %s30, 0
      %p241 = por %p239, %p240
      %s243 = sadd.s32 %s242, 1
      %p246 = scmp.eq.s32.totalorder %s24, 2
      %p247 = scmp.ne.s32.totalorder %s242, %s244
      %p248 = scmp.eq.s32.totalorder %s24, 0
      %p249 = por %p247, %p248
      %p250 = scmp.ne.s32.totalorder %s242, %s244
      %p251 = scmp.eq.s32.totalorder %s29, 2
      %p252 = por %p250, %p251
      %p253 = scmp.ne.s32.totalorder %s244, %s245
      %p254 = scmp.eq.s32.totalorder %s29, 0
      %p255 = por %p253, %p254
      %p256 = scmp.ne.s32.totalorder %s244, %s245
      %p257 = scmp.eq.s32.totalorder %s30, 2
      %p258 = por %p256, %p257
      %p260 = scmp.ne.s32.totalorder %s245, %s259
      %p261 = scmp.eq.s32.totalorder %s30, 0
      %p262 = por %p260, %p261
      %s264 = sadd.s32 %s263, 1
      %p267 = scmp.eq.s32.totalorder %s24, 2
      %p268 = scmp.ne.s32.totalorder %s263, %s265
      %p269 = scmp.eq.s32.totalorder %s24, 0
      %p270 = por %p268, %p269
      %p271 = scmp.ne.s32.totalorder %s263, %s265
      %p272 = scmp.eq.s32.totalorder %s29, 2
      %p273 = por %p271, %p272
      %p274 = scmp.ne.s32.totalorder %s265, %s266
      %p275 = scmp.eq.s32.totalorder %s29, 0
      %p276 = por %p274, %p275
      %p277 = scmp.ne.s32.totalorder %s265, %s266
      %p278 = scmp.eq.s32.totalorder %s30, 2
      %p279 = por %p277, %p278
      %p281 = scmp.ne.s32.totalorder %s266, %s280
      %p282 = scmp.eq.s32.totalorder %s30, 0
      %p283 = por %p281, %p282
      %s285 = sadd.s32 %s284, 1
      %p288 = scmp.eq.s32.totalorder %s24, 2
      %p289 = scmp.ne.s32.totalorder %s284, %s286
      %p290 = scmp.eq.s32.totalorder %s24, 0
      %p291 = por %p289, %p290
      %p292 = scmp.ne.s32.totalorder %s284, %s286
      %p293 = scmp.eq.s32.totalorder %s29, 2
      %p294 = por %p292, %p293
      %p295 = scmp.ne.s32.totalorder %s286, %s287
      %p296 = scmp.eq.s32.totalorder %s29, 0
      %p297 = por %p295, %p296
      %p298 = scmp.ne.s32.totalorder %s286, %s287
      %p299 = scmp.eq.s32.totalorder %s30, 2
      %p300 = por %p298, %p299
      %p302 = scmp.ne.s32.totalorder %s287, %s301
      %p303 = scmp.eq.s32.totalorder %s30, 0
      %p304 = por %p302, %p303
      %s306 = sadd.s32 %s305, 1
      %p309 = scmp.eq.s32.totalorder %s24, 2
      %p310 = scmp.ne.s32.totalorder %s305, %s307
      %p311 = scmp.eq.s32.totalorder %s24, 0
      %p312 = por %p310, %p311
      %p313 = scmp.ne.s32.totalorder %s305, %s307
      %p314 = scmp.eq.s32.totalorder %s29, 2
      %p315 = por %p313, %p314
      %p316 = scmp.ne.s32.totalorder %s307, %s308
      %p317 = scmp.eq.s32.totalorder %s29, 0
      %p318 = por %p316, %p317
      %p319 = scmp.ne.s32.totalorder %s307, %s308
      %p320 = scmp.eq.s32.totalorder %s30, 2
      %p321 = por %p319, %p320
      %p323 = scmp.ne.s32.totalorder %s308, %s322
      %p324 = scmp.eq.s32.totalorder %s30, 0
      %p325 = por %p323, %p324
      %p326 = scmp.le.s32.totalorder 1, %s24
      %p327 = scmp.lt.s32.totalorder %s24, 4
      %p328 = pnand %p326, %p327
      %p329 = pneg %p328
      // Predicated region
      $region9: #{_forward_core.2} parent=5 // pred_check
        _
      $region10: #{_forward_core.2} parent=5 // pred_check_branch
        %331 = sbr.rel (%p328) target = $region12
      $region11: #{_forward_core.2} parent=5 // pred_region
        %s332 = ssub.s32 %s24, 1
        // Predicated region
        $region13: #{_forward_core.2} parent=11 // pred_check
          %p333 = pneg %p45
        $region14: #{_forward_core.2} parent=11 // pred_check_branch
          %335 = sbr.rel (%p333) target = $region16
        $region15: #{_forward_core.2} parent=11 // pred_region
          _
        $region16: #{_forward_core.2} parent=11 // pred_fallthru
          _
        // Predicated region
        $region17: #{_forward_core.2} parent=11 // pred_check
          %p336 = pneg %p66
        $region18: #{_forward_core.2} parent=11 // pred_check_branch
          %338 = sbr.rel (%p336) target = $region20
        $region19: #{_forward_core.2} parent=11 // pred_region
          _
        $region20: #{_forward_core.2} parent=11 // pred_fallthru
          _
        // Predicated region
        $region21: #{_forward_core.2} parent=11 // pred_check
          %p339 = pneg %p87
        $region22: #{_forward_core.2} parent=11 // pred_check_branch
          %341 = sbr.rel (%p339) target = $region24
        $region23: #{_forward_core.2} parent=11 // pred_region
          _
        $region24: #{_forward_core.2} parent=11 // pred_fallthru
          _
        // Predicated region
        $region25: #{_forward_core.2} parent=11 // pred_check
          %p342 = pneg %p108
        $region26: #{_forward_core.2} parent=11 // pred_check_branch
          %344 = sbr.rel (%p342) target = $region28
        $region27: #{_forward_core.2} parent=11 // pred_region
          _
        $region28: #{_forward_core.2} parent=11 // pred_fallthru
          _
        // Predicated region
        $region29: #{_forward_core.2} parent=11 // pred_check
          %p345 = pneg %p129
        $region30: #{_forward_core.2} parent=11 // pred_check_branch
          %347 = sbr.rel (%p345) target = $region32
        $region31: #{_forward_core.2} parent=11 // pred_region
          _
        $region32: #{_forward_core.2} parent=11 // pred_fallthru
          _
        // Predicated region
        $region33: #{_forward_core.2} parent=11 // pred_check
          %p348 = pneg %p150
        $region34: #{_forward_core.2} parent=11 // pred_check_branch
          %350 = sbr.rel (%p348) target = $region36
        $region35: #{_forward_core.2} parent=11 // pred_region
          _
        $region36: #{_forward_core.2} parent=11 // pred_fallthru
          _
        // Predicated region
        $region37: #{_forward_core.2} parent=11 // pred_check
          %p351 = pneg %p171
        $region38: #{_forward_core.2} parent=11 // pred_check_branch
          %353 = sbr.rel (%p351) target = $region40
        $region39: #{_forward_core.2} parent=11 // pred_region
          _
        $region40: #{_forward_core.2} parent=11 // pred_fallthru
          _
        // Predicated region
        $region41: #{_forward_core.2} parent=11 // pred_check
          %p354 = pneg %p192
        $region42: #{_forward_core.2} parent=11 // pred_check_branch
          %356 = sbr.rel (%p354) target = $region44
        $region43: #{_forward_core.2} parent=11 // pred_region
          _
        $region44: #{_forward_core.2} parent=11 // pred_fallthru
          _
        // Predicated region
        $region45: #{_forward_core.2} parent=11 // pred_check
          %p357 = pneg %p213
        $region46: #{_forward_core.2} parent=11 // pred_check_branch
          %359 = sbr.rel (%p357) target = $region48
        $region47: #{_forward_core.2} parent=11 // pred_region
          _
        $region48: #{_forward_core.2} parent=11 // pred_fallthru
          _
        // Predicated region
        $region49: #{_forward_core.2} parent=11 // pred_check
          %p360 = pneg %p234
        $region50: #{_forward_core.2} parent=11 // pred_check_branch
          %362 = sbr.rel (%p360) target = $region52
        $region51: #{_forward_core.2} parent=11 // pred_region
          _
        $region52: #{_forward_core.2} parent=11 // pred_fallthru
          _
      $region12: #{_forward_core.2} parent=5 // pred_fallthru
        _
      %p363 = scmp.lt.s32.totalorder %s24, 3
      // Predicated region
      $region53: #{_forward_core.2} parent=5 // pred_check
        %p364 = pneg %p363
      $region54: #{_forward_core.2} parent=5 // pred_check_branch
        %366 = sbr.rel (%p364) target = $region56
      $region55: #{_forward_core.2} parent=5 // pred_region
        _
      $region56: #{_forward_core.2} parent=5 // pred_fallthru
        _
      %p367 = scmp.le.s32.totalorder 1, %s24
      %p368 = scmp.lt.s32.totalorder %s24, 4
      %p369 = pnand %p367, %p368
      %p370 = pneg %p369
      // Predicated region
      $region57: #{_forward_core.2} parent=5 // pred_check
        _
      $region58: #{_forward_core.2} parent=5 // pred_check_branch
        %372 = sbr.rel (%p369) target = $region60
      $region59: #{_forward_core.2} parent=5 // pred_region
        %s373 = ssub.s32 %s24, 1
        %p374 = pneg %p45
        %p375 = pneg %p42
        %p376 = pneg %p66
        %p377 = pneg %p63
        %p378 = pneg %p87
        %p379 = pneg %p84
        %p380 = pneg %p108
        %p381 = pneg %p105
        %p382 = pneg %p129
        %p383 = pneg %p126
        %p384 = pneg %p150
        %p385 = pneg %p147
        %p386 = pneg %p171
        %p387 = pneg %p168
        %p388 = pneg %p192
        %p389 = pneg %p189
        %p390 = pneg %p213
        %p391 = pneg %p210
        %p392 = pneg %p234
        %p393 = pneg %p231
        %p394 = pneg %p255
        %p395 = pneg %p252
        %p396 = pneg %p276
        %p397 = pneg %p273
        %p398 = pneg %p297
        %p399 = pneg %p294
        %p400 = pneg %p318
        %p401 = pneg %p315
        %p402 = scmp.eq.s32.totalorder %s29, 0
        // Predicated region
        $region61: #{_forward_core.2} parent=59 // pred_check
          %p403 = pneg %p402
        $region62: #{_forward_core.2} parent=59 // pred_check_branch
          %405 = sbr.rel (%p403) target = $region64
        $region63: #{_forward_core.2} parent=59 // pred_region
          %v406 = vld [vmem:[%s2] sm:$0xff]
          %v407 = vld [vmem:[%s2 + $0x8] sm:$0xff]
          %v408 = vld [vmem:[%s2 + $0x10] sm:$0xff]
          %v409 = vld [vmem:[%s2 + $0x18] sm:$0xff]
          %v410 = vld [vmem:[%s4] sm:$0xff]
          %v411 = vld [vmem:[%s4 + $0x8] sm:$0xff]
          %v412 = vld [vmem:[%s4 + $0x10] sm:$0xff]
          %v413 = vld [vmem:[%s4 + $0x18] sm:$0xff]
          %v414 = vld [vmem:[%s5] sm:$0x1]
          %v416 = vlaneseq
          %v417 = vshrl.u32 %v416, 7
          %v418 = vsub.s32 0, %v417
          %v419 = vrot.slane %v414, %v418
          %vm421 = vcmask 261120
          %v423 = vsel %vm421, %v406, 0
          %v426 = vsel %vm421, %v407, 0
          %v429 = vsel %vm421, %v408, 0
          %v432 = vsel %vm421, %v409, 0
          %434 = vmatprep.subr.mxu0 0.0
          %435 = vmatpush1.msra.mxu0 %v410
          %436 = vmatprep.subr.mxu0 0.0
          %437 = vmatpush1.msra.mxu0 %v411
          %438 = vmatprep.subr.mxu0 0.0
          %439 = vmatpush1.msra.mxu0 %v412
          %440 = vmatprep.subr.mxu0 0.0
          %441 = vmatpush1.msra.mxu0 %v413
          %442 = vmatprep.subr.mxu0 0.0
          %443 = vmatpush1.msra.mxu0 0.0
          %444 = vmatprep.subr.mxu0 0.0
          %445 = vmatpush1.msra.mxu0 0.0
          %446 = vmatprep.subr.mxu0 0.0
          %447 = vmatpush1.msra.mxu0 0.0
          %448 = vmatprep.subr.mxu0 0.0
          %449 = vmatpush1.msra.mxu0 0.0
          %450 = vmatprep.subr.mxu0 0.0
          %451 = vmatpush1.msra.mxu0 0.0
          %452 = vmatprep.subr.mxu0 0.0
          %453 = vmatpush1.msra.mxu0 0.0
          %454 = vmatprep.subr.mxu0 0.0
          %455 = vmatpush1.msra.mxu0 0.0
          %456 = vmatprep.subr.mxu0 0.0
          %457 = vmatpush1.msra.mxu0 0.0
          %458 = vmatprep.subr.mxu0 0.0
          %459 = vmatpush1.msra.mxu0 0.0
          %460 = vmatprep.subr.mxu0 0.0
          %461 = vmatpush1.msra.mxu0 0.0
          %462 = vmatprep.subr.mxu0 0.0
          %463 = vmatpush1.msra.mxu0 0.0
          %464 = vmatprep.subr.mxu0 0.0
          %465 = vmatpush1.msra.mxu0 0.0
          %466 = vmatprep.subr.mxu0 0.0
          %467 = vmatpush1.msra.mxu0 0.0
          %468 = vmatprep.subr.mxu0 0.0
          %469 = vmatpush1.msra.mxu0 0.0
          %470 = vmatprep.subr.mxu0 0.0
          %471 = vmatpush1.msra.mxu0 0.0
          %472 = vmatprep.subr.mxu0 0.0
          %473 = vmatpush1.msra.mxu0 0.0
          %474 = vmatprep.subr.mxu0 0.0
          %475 = vmatpush1.msra.mxu0 0.0
          %476 = vmatprep.subr.mxu0 0.0
          %477 = vmatpush1.msra.mxu0 0.0
          %478 = vmatprep.subr.mxu0 0.0
          %479 = vmatpush1.msra.mxu0 0.0
          %480 = vmatprep.subr.mxu0 0.0
          %481 = vmatpush1.msra.mxu0 0.0
          %482 = vmatprep.subr.mxu0 0.0
          %483 = vmatpush1.msra.mxu0 0.0
          %484 = vmatprep.subr.mxu0 0.0
          %485 = vmatpush1.msra.mxu0 0.0
          %486 = vmatprep.subr.mxu0 0.0
          %487 = vmatpush1.msra.mxu0 0.0
          %488 = vmatprep.subr.mxu0 0.0
          %489 = vmatpush1.msra.mxu0 0.0
          %490 = vmatprep.subr.mxu0 0.0
          %491 = vmatpush1.msra.mxu0 0.0
          %492 = vmatprep.subr.mxu0 0.0
          %493 = vmatpush1.msra.mxu0 0.0
          %494 = vmatprep.subr.mxu0 0.0
          %495 = vmatpush1.msra.mxu0 0.0
          %496 = vmatprep.subr.mxu0 0.0
          %497 = vmatpush1.msra.mxu0 0.0
          %498 = vmatprep.mubr.f32.mxu0 0.0
          %499 = vmatmul.mubr.f32.gmra.mrb[0].mxu0 %v423
          %v500 = vpop.f32.mrb[0].mxu0
          %v501 = vadd.f32 %v419, %v500
          %v502 = vpop.f32.mrb[0].mxu0
          %503 = vmatprep.mubr.f32.mxu0 0.0
          %504 = vmatmul.mubr.f32.gmra.mrb[0].mxu0 %v426
          %v505 = vpop.f32.mrb[0].mxu0
          %v506 = vadd.f32 %v419, %v505
          %v507 = vpop.f32.mrb[0].mxu0
          %508 = vmatprep.mubr.f32.mxu0 0.0
          %509 = vmatmul.mubr.f32.gmra.mrb[0].mxu0 %v429
          %v510 = vpop.f32.mrb[0].mxu0
          %v511 = vadd.f32 %v419, %v510
          %v512 = vpop.f32.mrb[0].mxu0
          %513 = vmatprep.mubr.f32.mxu0 0.0
          %514 = vmatmul.mubr.f32.gmra.mrb[0].mxu0 %v432
          %v515 = vpop.f32.mrb[0].mxu0
          %v516 = vadd.f32 %v419, %v515
          %v517 = vpop.f32.mrb[0].mxu0
          %518 = vdwg.mxu0
          %v519 = vtanh.pop %v501
          %v520 = vtanh.pop %v506
          %v521 = vtanh.pop %v511
          %v522 = vtanh.pop %v516
          %523 = vst.msk [vmem:[%s13] sm:$0xff] %vm421, %v519
          %524 = vst.msk [vmem:[%s13 + $0x8] sm:$0xff] %vm421, %v520
          %525 = vst.msk [vmem:[%s13 + $0x10] sm:$0xff] %vm421, %v521
          %526 = vst.msk [vmem:[%s13 + $0x18] sm:$0xff] %vm421, %v522
          %v527 = vld [vmem:[%s0] sm:$0x3]
          %vm528 = vcmp.eq.s32.totalorder %v527, 0
          %v529 = vsel %vm528, 1, 0
          %v530 = vcvt.s32.f32 %v529
          %v531 = vlaneseq
          %v532 = vshrl.u32 %v531, 7
          %v533 = vsub.s32 0, %v532
          %v534 = vrot.slane %v530, %v533
          %536 = vbcast.lane.b32.xlu0 %v534, 256
          %v537 = vpop.permute.xlu0 %536
          %s539 = sor.u32 256, 8
          %540 = vbcast.lane.b32.xlu0 %v534, %s539
          %v541 = vpop.permute.xlu0 %540
          %v542 = vlaneseq
          %v543 = vshrl.u32 %v542, 7
          %v544 = vsub.s32 1, %v543
          %v545 = vrot.slane %v530, %v544
          %547 = vbcast.lane.b32.xlu0 %v545, 256
          %v548 = vpop.permute.xlu0 %547
          %s550 = sor.u32 256, 8
          %551 = vbcast.lane.b32.xlu0 %v545, %s550
          %v552 = vpop.permute.xlu0 %551
          %v553 = vmul.f32 %v519, %v537
          %v554 = vmul.f32 %v520, %v541
          %v555 = vmul.f32 %v521, %v548
          %v556 = vmul.f32 %v522, %v552
          %v557 = vsel %vm421, %v553, 0.0
          %v558 = vsel %vm421, %v554, 0.0
          %v559 = vadd.f32 %v557, %v558
          %v560 = vrot.slane %v559, 4
          %v561 = vadd.f32 %v559, %v560
          %v562 = vrot.slane %v561, 2
          %v563 = vadd.f32 %v561, %v562
          %v564 = vrot.slane %v563, 1
          %v565 = vadd.f32 %v563, %v564
          %v566 = vsel %vm421, %v555, 0.0
          %v567 = vsel %vm421, %v556, 0.0
          %v568 = vadd.f32 %v566, %v567
          %v569 = vrot.slane %v568, 4
          %v570 = vadd.f32 %v568, %v569
          %v571 = vrot.slane %v570, 2
          %v572 = vadd.f32 %v570, %v571
          %v573 = vrot.slane %v572, 1
          %v574 = vadd.f32 %v572, %v573
          %vm577 = vcmask 1041409
          %v578 = vsel %vm577, %v574, %v565
          %vm580 = vcmask 254976
          %581 = vst.msk [vmem:[#allocation4] sm:$0x3] %vm580, %v578
          %vm582 = vcmask 123904
          %v583 = vsel %vm582, %v530, 0.0
          %584 = vadd.xlane.f32.xlu0 %v583
          %v585 = vpop.xlane.xlu0 %584
          %vm586 = vcmask 1024
          %587 = vst.msk [vmem:[#allocation5] sm:$0x3] %vm586, %v585
          %v588 = vlaneseq
          %v589 = vshrl.u32 %v588, 7
          %vm590 = vcmp.lt.s32.totalorder %v589, 3
          %v592 = vunpack.c.l.s4 1966171168
          %v593 = vunpack.c.0.s8 %v592
          %v594 = vlaneseq
          %v595 = vshrl.u32 %v594, 7
          %v596 = vsub.s32 %v593, %v595
          %v597 = vrot.slane %v527, %v596
          %v598 = vcombine.high %v597, %v597
          %v600 = vunpack.c.l.s4 1966171168
          %v601 = vunpack.c.0.s8 %v600
          %v602 = vlaneseq
          %v603 = vshrl.u32 %v602, 7
          %v604 = vsub.s32 %v601, %v603
          %v605 = vrot.slane %v597, %v604
          %v607 = vunpack.c.l.s4 1966171168
          %v608 = vunpack.c.0.s8 %v607
          %v609 = vlaneseq
          %v610 = vshrl.u32 %v609, 7
          %v611 = vsub.s32 %v608, %v610
          %v612 = vrot.slane %v598, %v611
          %v613 = vadd.s32 %v589, 1
          %v614 = vlaneseq
          %v615 = vshrl.u32 %v614, 7
          %v616 = vsub.s32 0, %v615
          %v617 = vrot.slane %v605, %v616
          %v618 = vlaneseq
          %v619 = vshrl.u32 %v618, 7
          %v620 = vsub.s32 0, %v619
          %v621 = vrot.slane %v612, %v620
          %vm622 = vcmp.eq.s32.totalorder %v617, %v613
          %vm623 = vcmp.eq.s32.totalorder %v621, %v613
          %v624 = vsel %vm622, 1, 0
          %v625 = vsel %vm623, 1, 0
          %v626 = vcvt.s32.f32 %v624
          %v627 = vcvt.s32.f32 %v625
          %v628 = vsel %vm590, %v626, 0.0
          %v629 = vsel %vm590, %v627, 0.0
          %vm630 = vcmask 125952
          %v631 = vsel %vm630, %v628, 0.0
          %632 = vadd.xlane.f32.xlu0 %v631
          %v633 = vpop.xlane.xlu0 %632
          %v634 = vsel %vm630, %v629, 0.0
          %635 = vadd.xlane.f32.xlu0 %v634
          %v636 = vpop.xlane.xlu0 %635
          %v637 = vlaneseq
          %v638 = vand.u32 %v637, 127
          %vm639 = vcmp.eq.s32.totalorder %v638, 3
          %v640 = vsel %vm639, 1, 0
          %v641 = vcvt.s32.f32 %v640
          %643 = vbcast.lane.b32.xlu0 %v641, 256
          %v644 = vpop.permute.xlu0 %643
          %v645 = vld [vmem:[%s3] sm:$0x1]
          %v647 = vlaneseq
          %v648 = vshrl.u32 %v647, 7
          %v649 = vsub.s32 0, %v648
          %v650 = vrot.slane %v645, %v649
          %v652 = vmul.f32 %v644, %v650
          %vm653 = vcmask 130048
          %v655 = vsel %vm653, %v628, 0
          %657 = vmatprep.subr.mxu0 0.0
          %658 = vmatpush1.msra.mxu0 %v519
          %659 = vmatprep.subr.mxu0 0.0
          %660 = vmatpush1.msra.mxu0 %v520
          %661 = vmatprep.subr.mxu0 0.0
          %662 = vmatpush1.msra.mxu0 0.0
          %663 = vmatprep.subr.mxu0 0.0
          %664 = vmatpush1.msra.mxu0 0.0
          %665 = vmatprep.subr.mxu0 0.0
          %666 = vmatpush1.msra.mxu0 0.0
          %667 = vmatprep.subr.mxu0 0.0
          %668 = vmatpush1.msra.mxu0 0.0
          %669 = vmatprep.subr.mxu0 0.0
          %670 = vmatpush1.msra.mxu0 0.0
          %671 = vmatprep.subr.mxu0 0.0
          %672 = vmatpush1.msra.mxu0 0.0
          %673 = vmatprep.subr.mxu0 0.0
          %674 = vmatpush1.msra.mxu0 0.0
          %675 = vmatprep.subr.mxu0 0.0
          %676 = vmatpush1.msra.mxu0 0.0
          %677 = vmatprep.subr.mxu0 0.0
          %678 = vmatpush1.msra.mxu0 0.0
          %679 = vmatprep.subr.mxu0 0.0
          %680 = vmatpush1.msra.mxu0 0.0
          %681 = vmatprep.subr.mxu0 0.0
          %682 = vmatpush1.msra.mxu0 0.0
          %683 = vmatprep.subr.mxu0 0.0
          %684 = vmatpush1.msra.mxu0 0.0
          %685 = vmatprep.subr.mxu0 0.0
          %686 = vmatpush1.msra.mxu0 0.0
          %687 = vmatprep.subr.mxu0 0.0
          %688 = vmatpush1.msra.mxu0 0.0
          %689 = vmatprep.subr.mxu0 0.0
          %690 = vmatpush1.msra.mxu0 0.0
          %691 = vmatprep.subr.mxu0 0.0
          %692 = vmatpush1.msra.mxu0 0.0
          %693 = vmatprep.subr.mxu0 0.0
          %694 = vmatpush1.msra.mxu0 0.0
          %695 = vmatprep.subr.mxu0 0.0
          %696 = vmatpush1.msra.mxu0 0.0
          %697 = vmatprep.subr.mxu0 0.0
          %698 = vmatpush1.msra.mxu0 0.0
          %699 = vmatprep.subr.mxu0 0.0
          %700 = vmatpush1.msra.mxu0 0.0
          %701 = vmatprep.subr.mxu0 0.0
          %702 = vmatpush1.msra.mxu0 0.0
          %703 = vmatprep.subr.mxu0 0.0
          %704 = vmatpush1.msra.mxu0 0.0
          %705 = vmatprep.subr.mxu0 0.0
          %706 = vmatpush1.msra.mxu0 0.0
          %707 = vmatprep.subr.mxu0 0.0
          %708 = vmatpush1.msra.mxu0 0.0
          %709 = vmatprep.subr.mxu0 0.0
          %710 = vmatpush1.msra.mxu0 0.0
          %711 = vmatprep.subr.mxu0 0.0
          %712 = vmatpush1.msra.mxu0 0.0
          %713 = vmatprep.subr.mxu0 0.0
          %714 = vmatpush1.msra.mxu0 0.0
          %715 = vmatprep.subr.mxu0 0.0
          %716 = vmatpush1.msra.mxu0 0.0
          %717 = vmatprep.subr.mxu0 0.0
          %718 = vmatpush1.msra.mxu0 0.0
          %719 = vmatprep.subr.mxu0 0.0
          %720 = vmatpush1.msra.mxu0 0.0
          %721 = vmatprep.mubr.f32.mxu0 0.0
          %722 = vmatmul.mubr.f32.gmra.mrb[0].mxu0 %v655
          %v723 = vpop.f32.mrb[0].mxu0
          %v724 = vadd.f32 %v652, %v723
          %v725 = vpop.f32.mrb[0].mxu0
          %726 = vdwg.mxu0
          %v728 = vsel %vm653, %v629, 0
          %730 = vmatprep.subr.mxu0 0.0
          %731 = vmatpush1.msra.mxu0 %v521
          %732 = vmatprep.subr.mxu0 0.0
          %733 = vmatpush1.msra.mxu0 %v522
          %734 = vmatprep.subr.mxu0 0.0
          %735 = vmatpush1.msra.mxu0 0.0
          %736 = vmatprep.subr.mxu0 0.0
          %737 = vmatpush1.msra.mxu0 0.0
          %738 = vmatprep.subr.mxu0 0.0
          %739 = vmatpush1.msra.mxu0 0.0
          %740 = vmatprep.subr.mxu0 0.0
          %741 = vmatpush1.msra.mxu0 0.0
          %742 = vmatprep.subr.mxu0 0.0
          %743 = vmatpush1.msra.mxu0 0.0
          %744 = vmatprep.subr.mxu0 0.0
          %745 = vmatpush1.msra.mxu0 0.0
          %746 = vmatprep.subr.mxu0 0.0
          %747 = vmatpush1.msra.mxu0 0.0
          %748 = vmatprep.subr.mxu0 0.0
          %749 = vmatpush1.msra.mxu0 0.0
          %750 = vmatprep.subr.mxu0 0.0
          %751 = vmatpush1.msra.mxu0 0.0
          %752 = vmatprep.subr.mxu0 0.0
          %753 = vmatpush1.msra.mxu0 0.0
          %754 = vmatprep.subr.mxu0 0.0
          %755 = vmatpush1.msra.mxu0 0.0
          %756 = vmatprep.subr.mxu0 0.0
          %757 = vmatpush1.msra.mxu0 0.0
          %758 = vmatprep.subr.mxu0 0.0
          %759 = vmatpush1.msra.mxu0 0.0
          %760 = vmatprep.subr.mxu0 0.0
          %761 = vmatpush1.msra.mxu0 0.0
          %762 = vmatprep.subr.mxu0 0.0
          %763 = vmatpush1.msra.mxu0 0.0
          %764 = vmatprep.subr.mxu0 0.0
          %765 = vmatpush1.msra.mxu0 0.0
          %766 = vmatprep.subr.mxu0 0.0
          %767 = vmatpush1.msra.mxu0 0.0
          %768 = vmatprep.subr.mxu0 0.0
          %769 = vmatpush1.msra.mxu0 0.0
          %770 = vmatprep.subr.mxu0 0.0
          %771 = vmatpush1.msra.mxu0 0.0
          %772 = vmatprep.subr.mxu0 0.0
          %773 = vmatpush1.msra.mxu0 0.0
          %774 = vmatprep.subr.mxu0 0.0
          %775 = vmatpush1.msra.mxu0 0.0
          %776 = vmatprep.subr.mxu0 0.0
          %777 = vmatpush1.msra.mxu0 0.0
          %778 = vmatprep.subr.mxu0 0.0
          %779 = vmatpush1.msra.mxu0 0.0
          %780 = vmatprep.subr.mxu0 0.0
          %781 = vmatpush1.msra.mxu0 0.0
          %782 = vmatprep.subr.mxu0 0.0
          %783 = vmatpush1.msra.mxu0 0.0
          %784 = vmatprep.subr.mxu0 0.0
          %785 = vmatpush1.msra.mxu0 0.0
          %786 = vmatprep.subr.mxu0 0.0
          %787 = vmatpush1.msra.mxu0 0.0
          %788 = vmatprep.subr.mxu0 0.0
          %789 = vmatpush1.msra.mxu0 0.0
          %790 = vmatprep.subr.mxu0 0.0
          %791 = vmatpush1.msra.mxu0 0.0
          %792 = vmatprep.subr.mxu0 0.0
          %793 = vmatpush1.msra.mxu0 0.0
          %794 = vmatprep.mubr.f32.mxu0 0.0
          %795 = vmatmul.mubr.f32.gmra.mrb[0].mxu0 %v728
          %v796 = vpop.f32.mrb[0].mxu0
          %v797 = vadd.f32 %v652, %v796
          %v798 = vpop.f32.mrb[0].mxu0
          %799 = vdwg.mxu0
          %vm800 = vcmask 257024
          %801 = vst.msk [vmem:[#allocation2] sm:$0xf] %vm800, %v724
          %802 = vst.msk [vmem:[#allocation2 + $0x4] sm:$0xf] %vm800, %v797
          %805 = vbcast.lane.b32.xlu0 %v641, 256
          %v806 = vpop.permute.xlu0 %805
          %v808 = vadd.f32 %v633, %v806
          %v809 = vadd.f32 %v636, %v806
          %812 = vset.pattern.permute.xlu0 0
          %813 = vperm.xlu0 %812, %v808
          %v814 = vpop.permute.xlu0 %813
          %815 = vset.pattern.permute.xlu0 0
          %816 = vperm.xlu0 %815, %v809
          %v817 = vpop.permute.xlu0 %816
          %v818 = vlaneseq
          %v819 = vshrl.u32 %v818, 7
          %v820 = vsub.s32 %v638, %v819
          %v821 = vrot.slane %v814, %v820
          %v822 = vlaneseq
          %v823 = vshrl.u32 %v822, 7
          %v824 = vsub.s32 %v638, %v823
          %v825 = vrot.slane %v817, %v824
          %v826 = vsel %vm577, %v825, %v821
          %vm828 = vcmask 25600
          %829 = vst.msk [vmem:[#allocation3] sm:$0x3] %vm828, %v826
          %830 = vst.msk [vmem:[#allocation6] sm:$0x3] %vm828, 1.0
          %831 = vst.msk [vmem:[#allocation7] sm:$0x3] %vm828, 0.0
          %vm832 = vcmask 0
          %833 = vst.msk [vmem:[#allocation8] sm:$0x1] %vm832, 0.0
          %834 = vst.msk [vmem:[#allocation9] sm:$0x1] %vm832, 0.0
          %835 = vst [vmem:[#allocation11] sm:$0x3] 0.0
          %836 = vst [vmem:[#allocation11 + $0x2] sm:$0x3] 0.0
          %837 = vst [vmem:[#allocation11 + $0x4] sm:$0x3] 0.0
        $region64: #{_forward_core.2} parent=59 // pred_fallthru
          _
        %v838 = vld [vmem:[#allocation8] sm:$0x1]
        %s839 = vtos %v838
        %p840 = scmp.lt.f32.partialorder %s839, 0.5
        // Predicated region
        $region65: #{_forward_core.2} parent=59 // pred_check
          %p841 = pneg %p840
        $region66: #{_forward_core.2} parent=59 // pred_check_branch
          %843 = sbr.rel (%p841) target = $region68
        $region67: #{_forward_core.2} parent=59 // pred_region
          %v844 = vld [vmem:[#allocation2] sm:$0xf]
          %v845 = vld [vmem:[#allocation2 + $0x4] sm:$0xf]
          %v846 = vld [vmem:[#allocation3] sm:$0x3]
          %v847 = vld [vmem:[#allocation4] sm:$0x3]
          %v848 = vld [vmem:[#allocation5] sm:$0x3]
          %v849 = vld [vmem:[#allocation6] sm:$0x3]
          %v852 = vunpack.c.l.s4 1966171168
          %v853 = vunpack.c.0.s8 %v852
          %v854 = vlaneseq
          %v855 = vshrl.u32 %v854, 7
          %v856 = vsub.s32 %v853, %v855
          %v857 = vrot.slane %v847, %v856
          %v858 = vcombine.high %v857, %v857
          %v860 = vunpack.c.l.s4 1966171168
          %v861 = vunpack.c.0.s8 %v860
          %v862 = vlaneseq
          %v863 = vshrl.u32 %v862, 7
          %v864 = vsub.s32 %v861, %v863
          %v865 = vrot.slane %v857, %v864
          %v867 = vunpack.c.l.s4 1966171168
          %v868 = vunpack.c.0.s8 %v867
          %v869 = vlaneseq
          %v870 = vshrl.u32 %v869, 7
          %v871 = vsub.s32 %v868, %v870
          %v872 = vrot.slane %v858, %v871
          %v873 = vlaneseq
          %v874 = vshrl.u32 %v873, 7
          %v875 = vsub.s32 0, %v874
          %v876 = vrot.slane %v865, %v875
          %v877 = vlaneseq
          %v878 = vshrl.u32 %v877, 7
          %v879 = vsub.s32 0, %v878
          %v880 = vrot.slane %v872, %v879
          %v883 = vadd.f32 %v876, %v844
          %v884 = vadd.f32 %v880, %v845
          %886 = vset.pattern.permute.xlu0 0
          %887 = vperm.xlu0 %886, %v848
          %v888 = vpop.permute.xlu0 %887
          %v890 = vadd.f32 %v888, %v846
          %v891 = vrcp.pop %v890
          %v892 = vlaneseq
          %v893 = vshrl.u32 %v892, 7
          %v894 = vsub.s32 0, %v893
          %v895 = vrot.slane %v891, %v894
          %897 = vbcast.lane.b32.xlu0 %v895, 256
          %v898 = vpop.permute.xlu0 %897
          %v899 = vlaneseq
          %v900 = vshrl.u32 %v899, 7
          %v901 = vsub.s32 1, %v900
          %v902 = vrot.slane %v891, %v901
          %904 = vbcast.lane.b32.xlu0 %v902, 256
          %v905 = vpop.permute.xlu0 %904
          %v906 = vmul.f32 %v883, %v898
          %v907 = vmul.f32 %v884, %v905
          %v908 = vld [vmem:[%s6] sm:$0xff]
          %v909 = vld [vmem:[%s6 + $0x8] sm:$0xff]
          %v910 = vld [vmem:[%s6 + $0x10] sm:$0xff]
          %v911 = vld [vmem:[%s6 + $0x18] sm:$0xff]
          %v912 = vld [vmem:[%s7] sm:$0x1]
          %v914 = vlaneseq
          %v915 = vshrl.u32 %v914, 7
          %v916 = vsub.s32 0, %v915
          %v917 = vrot.slane %v912, %v916
          %v921 = vcombine.low %v906, %v907
          %vm922 = vcmask 261120
          %v923 = vsel %vm922, %v921, 0
          %925 = vmatprep.subr.mxu0 0.0
          %926 = vmatpush1.msra.mxu0 %v908
          %927 = vmatprep.subr.mxu0 0.0
          %928 = vmatpush1.msra.mxu0 %v909
          %929 = vmatprep.subr.mxu0 0.0
          %930 = vmatpush1.msra.mxu0 %v910
          %931 = vmatprep.subr.mxu0 0.0
          %932 = vmatpush1.msra.mxu0 %v911
          %933 = vmatprep.subr.mxu0 0.0
          %934 = vmatpush1.msra.mxu0 0.0
          %935 = vmatprep.subr.mxu0 0.0
          %936 = vmatpush1.msra.mxu0 0.0
          %937 = vmatprep.subr.mxu0 0.0
          %938 = vmatpush1.msra.mxu0 0.0
          %939 = vmatprep.subr.mxu0 0.0
          %940 = vmatpush1.msra.mxu0 0.0
          %941 = vmatprep.subr.mxu0 0.0
          %942 = vmatpush1.msra.mxu0 0.0
          %943 = vmatprep.subr.mxu0 0.0
          %944 = vmatpush1.msra.mxu0 0.0
          %945 = vmatprep.subr.mxu0 0.0
          %946 = vmatpush1.msra.mxu0 0.0
          %947 = vmatprep.subr.mxu0 0.0
          %948 = vmatpush1.msra.mxu0 0.0
          %949 = vmatprep.subr.mxu0 0.0
          %950 = vmatpush1.msra.mxu0 0.0
          %951 = vmatprep.subr.mxu0 0.0
          %952 = vmatpush1.msra.mxu0 0.0
          %953 = vmatprep.subr.mxu0 0.0
          %954 = vmatpush1.msra.mxu0 0.0
          %955 = vmatprep.subr.mxu0 0.0
          %956 = vmatpush1.msra.mxu0 0.0
          %957 = vmatprep.subr.mxu0 0.0
          %958 = vmatpush1.msra.mxu0 0.0
          %959 = vmatprep.subr.mxu0 0.0
          %960 = vmatpush1.msra.mxu0 0.0
          %961 = vmatprep.subr.mxu0 0.0
          %962 = vmatpush1.msra.mxu0 0.0
          %963 = vmatprep.subr.mxu0 0.0
          %964 = vmatpush1.msra.mxu0 0.0
          %965 = vmatprep.subr.mxu0 0.0
          %966 = vmatpush1.msra.mxu0 0.0
          %967 = vmatprep.subr.mxu0 0.0
          %968 = vmatpush1.msra.mxu0 0.0
          %969 = vmatprep.subr.mxu0 0.0
          %970 = vmatpush1.msra.mxu0 0.0
          %971 = vmatprep.subr.mxu0 0.0
          %972 = vmatpush1.msra.mxu0 0.0
          %973 = vmatprep.subr.mxu0 0.0
          %974 = vmatpush1.msra.mxu0 0.0
          %975 = vmatprep.subr.mxu0 0.0
          %976 = vmatpush1.msra.mxu0 0.0
          %977 = vmatprep.subr.mxu0 0.0
          %978 = vmatpush1.msra.mxu0 0.0
          %979 = vmatprep.subr.mxu0 0.0
          %980 = vmatpush1.msra.mxu0 0.0
          %981 = vmatprep.subr.mxu0 0.0
          %982 = vmatpush1.msra.mxu0 0.0
          %983 = vmatprep.subr.mxu0 0.0
          %984 = vmatpush1.msra.mxu0 0.0
          %985 = vmatprep.subr.mxu0 0.0
          %986 = vmatpush1.msra.mxu0 0.0
          %987 = vmatprep.subr.mxu0 0.0
          %988 = vmatpush1.msra.mxu0 0.0
          %989 = vmatprep.mubr.f32.mxu0 0.0
          %990 = vmatmul.mubr.f32.gmra.mrb[0].mxu0 %v923
          %v991 = vpop.f32.mrb[0].mxu0
          %v992 = vadd.f32 %v917, %v991
          %v993 = vpop.f32.mrb[0].mxu0
          %994 = vdwg.mxu0
          %v995 = vmax.f32 %v992, 0.0
          %v996 = vld [vmem:[%s8] sm:$0x1]
          %v998 = vlaneseq
          %v999 = vshrl.u32 %v998, 7
          %v1000 = vsub.s32 0, %v999
          %v1001 = vrot.slane %v996, %v1000
          %v1003 = vmul.f32 %v995, %v1001
          %vm1004 = vcmask 130048
          %v1005 = vsel %vm1004, %v1003, 0.0
          %1006 = vadd.xlane.f32.xlu0 %v1005
          %v1007 = vpop.xlane.xlu0 %1006
          %v1008 = vld [vmem:[#allocation10] sm:$0x1]
          %v1010 = vlaneseq
          %v1011 = vshrl.u32 %v1010, 7
          %v1012 = vsub.s32 0, %v1011
          %v1013 = vrot.slane %v1008, %v1012
          %v1015 = vadd.f32 %v1007, %v1013
          %v1017 = vcombine.high %v1015, %v1015
          %vm1018 = vcmp.gt.f32.partialorder %v849, 0.0
          %1019 = vset.pattern.permute.xlu0 0
          %1020 = vperm.xlu0 %1019, %v1015
          %v1021 = vpop.permute.xlu0 %1020
          %1022 = vset.pattern.permute.xlu0 0
          %1023 = vperm.xlu0 %1022, %v1017
          %v1024 = vpop.permute.xlu0 %1023
          %v1025 = vlaneseq
          %v1026 = vand.u32 %v1025, 127
          %v1027 = vlaneseq
          %v1028 = vshrl.u32 %v1027, 7
          %v1029 = vsub.s32 %v1026, %v1028
          %v1030 = vrot.slane %v1021, %v1029
          %v1031 = vlaneseq
          %v1032 = vshrl.u32 %v1031, 7
          %v1033 = vsub.s32 %v1026, %v1032
          %v1034 = vrot.slane %v1024, %v1033
          %vm1035 = vcmask 1041409
          %v1036 = vsel %vm1035, %v1034, %v1030
          %v1038 = vsel %vm1018, %v1036, -1e+09
          %vm1039 = vcmask 25600
          %v1040 = vsel %vm1039, %v1038, -inf
          %1041 = vmax.xlane.f32.xlu0 %v1040
          %v1042 = vpop.xlane.xlu0 %1041
          %vm1043 = vcmp.ge.f32.partialorder %v1038, %v1042
          %v1044 = vsel %vm1043, %v1026, 4
          %v1045 = vsel %vm1039, %v1044, 2147483647
          %v1046 = vand.u32 %v1045, 65535
          %v1047 = vshra.s32 %v1045, 16
          %v1048 = vcvt.s32.f32 %v1046
          %v1049 = vcvt.s32.f32 %v1047
          %1050 = vmin.xlane.f32.xlu0 %v1049
          %v1051 = vpop.xlane.xlu0 %1050
          %vm1052 = vcmp.eq.f32.partialorder %v1049, %v1051
          %v1053 = vsel %vm1052, %v1048, inf
          %1054 = vmin.xlane.f32.xlu0 %v1053
          %v1055 = vpop.xlane.xlu0 %1054
          %v1056 = vcvt.f32.s32 %v1055
          %v1057 = vcvt.f32.s32 %v1051
          %v1058 = vshll.u32 %v1057, 16
          %v1059 = vadd.s32 %v1058, %v1056
          %vm1060 = vcmp.eq.s32.totalorder %v1026, %v1059
          %v1061 = vsel %vm1060, 1, 0
          %v1062 = vcvt.s32.f32 %v1061
          %vm1063 = vcmp.gt.f32.partialorder %v1062, 0.0
          %v1064 = vsub.f32 1.0, %v1062
          %v1065 = vmul.f32 %v1064, %v849
          %v1066 = vsel %vm1063, 1, 0
          %1067 = vrot.lane.b32.xlu0 %v1066, 125
          %v1068 = vpop.permute.xlu0 %1067
          %s1069 = vtos %v1068
          %v1070 = vstv %s1069
          %vm1071 = vcmp.eq.s32.totalorder %v1070, 1
          %v1072 = vsel %vm1071, %v849, %v1065
          %1073 = vst.msk [vmem:[#allocation6] sm:$0x3] %vm1039, %v1072
          %v1074 = vlaneseq
          %v1075 = vshrl.u32 %v1074, 7
          %v1076 = vsub.s32 0, %v1075
          %v1077 = vrot.slane %v1062, %v1076
          %1079 = vbcast.lane.b32.xlu0 %v1077, 256
          %v1080 = vpop.permute.xlu0 %1079
          %v1081 = vlaneseq
          %v1082 = vshrl.u32 %v1081, 7
          %v1083 = vsub.s32 1, %v1082
          %v1084 = vrot.slane %v1062, %v1083
          %1086 = vbcast.lane.b32.xlu0 %v1084, 256
          %v1087 = vpop.permute.xlu0 %1086
          %v1088 = vmul.f32 %v1080, %v883
          %v1089 = vmul.f32 %v1087, %v884
          %vm1090 = vcmask 257024
          %v1091 = vsel %vm1090, %v1088, 0.0
          %v1092 = vrot.slane %v1091, 4
          %v1093 = vadd.f32 %v1091, %v1092
          %v1094 = vrot.slane %v1093, 2
          %v1095 = vadd.f32 %v1093, %v1094
          %v1096 = vrot.slane %v1095, 1
          %v1097 = vadd.f32 %v1095, %v1096
          %v1098 = vsel %vm1090, %v1089, 0.0
          %v1099 = vrot.slane %v1098, 4
          %v1100 = vadd.f32 %v1098, %v1099
          %v1101 = vrot.slane %v1100, 2
          %v1102 = vadd.f32 %v1100, %v1101
          %v1103 = vrot.slane %v1102, 1
          %v1104 = vadd.f32 %v1102, %v1103
          %v1107 = vsel %vm1035, %v1104, %v1097
          %vm1109 = vcmask 254976
          %1110 = vst.msk [vmem:[#allocation4] sm:$0x3] %vm1109, %v1107
          %v1111 = vmul.f32 %v1062, %v890
          %v1112 = vsel %vm1039, %v1111, 0.0
          %1113 = vadd.xlane.f32.xlu0 %v1112
          %v1114 = vpop.xlane.xlu0 %1113
          %vm1115 = vcmask 1024
          %1116 = vst.msk [vmem:[#allocation5] sm:$0x3] %vm1115, %v1114
          %v1117 = vld [vmem:[#allocation7] sm:$0x3]
          %v1118 = vadd.f32 %v1117, %v1062
          %1119 = vst.msk [vmem:[#allocation7] sm:$0x3] %vm1039, %v1118
          %v1120 = vld [vmem:[#allocation9] sm:$0x1]
          %v1121 = vadd.f32 %v1120, 1.0
          %vm1122 = vcmask 0
          %1123 = vst.msk [vmem:[#allocation9] sm:$0x1] %vm1122, %v1121
          %v1124 = vld [vmem:[#allocation8] sm:$0x1]
          %v1127 = vunpack.c.l.s4 1966171168
          %v1128 = vunpack.c.0.s8 %v1127
          %v1129 = vlaneseq
          %v1130 = vshrl.u32 %v1129, 7
          %v1131 = vsub.s32 %v1128, %v1130
          %v1132 = vrot.slane %v1062, %v1131
          %v1134 = vunpack.c.l.s4 1966171168
          %v1135 = vunpack.c.0.s8 %v1134
          %v1136 = vlaneseq
          %v1137 = vshrl.u32 %v1136, 7
          %v1138 = vsub.s32 %v1135, %v1137
          %v1139 = vrot.slane %v1132, %v1138
          %1140 = vrot.lane.b32.xlu0 %v1139, 125
          %v1141 = vpop.permute.xlu0 %1140
          %v1143 = vadd.f32 %v1124, %v1141
          %1144 = vst.msk [vmem:[#allocation8] sm:$0x1] %vm1122, %v1143
          %vm1145 = vcmp.eq.s32.totalorder %v1026, 0
          %1147 = vset.pattern.permute.xlu0 0
          %1148 = vperm.xlu0 %1147, %v1038
          %v1149 = vpop.permute.xlu0 %1148
          %v1151 = vsel %vm1145, %v1149, 0.0
          %vm1152 = vcmp.eq.s32.totalorder %v1026, 1
          %1153 = vset.pattern.permute.xlu0 1
          %1154 = vperm.xlu0 %1153, %v1038
          %v1155 = vpop.permute.xlu0 %1154
          %v1157 = vsel %vm1152, %v1155, %v1151
          %vm1158 = vcmp.eq.s32.totalorder %v1026, 2
          %1159 = vset.pattern.permute.xlu0 2
          %1160 = vperm.xlu0 %1159, %v1038
          %v1161 = vpop.permute.xlu0 %1160
          %v1163 = vsel %vm1158, %v1161, %v1157
          %vm1164 = vcmp.eq.s32.totalorder %v1026, 3
          %1165 = vset.pattern.permute.xlu0 3
          %1166 = vperm.xlu0 %1165, %v1038
          %v1167 = vpop.permute.xlu0 %1166
          %v1169 = vsel %vm1164, %v1167, %v1163
          %s1170 = smul.u32 %s29, 2
          %s1171 = scalar_lea.vmem [#allocation11], %s1170
          %1172 = vst [vmem:[%s1171] sm:$0x3] %v1169
        $region68: #{_forward_core.2} parent=59 // pred_fallthru
          _
        %p1173 = scmp.eq.s32.totalorder %s29, 2
        // Predicated region
        $region69: #{_forward_core.2} parent=59 // pred_check
          %p1174 = pneg %p1173
        $region70: #{_forward_core.2} parent=59 // pred_check_branch
          %1176 = sbr.rel (%p1174) target = $region72
        $region71: #{_forward_core.2} parent=59 // pred_region
          %v1177 = vld [vmem:[#allocation7] sm:$0x3]
          %v1178 = vmin.f32 %v1177, 1.0
          %v1179 = vld [vmem:[%s1] sm:$0x3]
          %vm1180 = vcmp.eq.s32.totalorder %v1179, 0
          %v1181 = vsel %vm1180, 1, 0
          %v1182 = vcvt.s32.f32 %v1181
          %vm1183 = vcmp.eq.s32.totalorder %v1179, 1
          %v1184 = vsel %vm1183, 1, 0
          %v1185 = vcvt.s32.f32 %v1184
          %1187 = vset.pattern.permute.xlu0 0
          %1188 = vperm.xlu0 %1187, %v1178
          %v1189 = vpop.permute.xlu0 %1188
          %v1191 = vmul.f32 %v1189, %v1185
          %v1192 = vadd.f32 %v1182, %v1191
          %vm1193 = vcmp.eq.s32.totalorder %v1179, 2
          %v1194 = vsel %vm1193, 1, 0
          %v1195 = vcvt.s32.f32 %v1194
          %1196 = vset.pattern.permute.xlu0 1
          %1197 = vperm.xlu0 %1196, %v1178
          %v1198 = vpop.permute.xlu0 %1197
          %v1200 = vmul.f32 %v1198, %v1195
          %v1201 = vadd.f32 %v1192, %v1200
          %vm1202 = vcmp.eq.s32.totalorder %v1179, 3
          %v1203 = vsel %vm1202, 1, 0
          %v1204 = vcvt.s32.f32 %v1203
          %1205 = vset.pattern.permute.xlu0 2
          %1206 = vperm.xlu0 %1205, %v1178
          %v1207 = vpop.permute.xlu0 %1206
          %v1209 = vmul.f32 %v1207, %v1204
          %v1210 = vadd.f32 %v1201, %v1209
          %vm1211 = vcmp.eq.s32.totalorder %v1179, 4
          %v1212 = vsel %vm1211, 1, 0
          %v1213 = vcvt.s32.f32 %v1212
          %1214 = vset.pattern.permute.xlu0 3
          %1215 = vperm.xlu0 %1214, %v1178
          %v1216 = vpop.permute.xlu0 %1215
          %v1218 = vmul.f32 %v1216, %v1213
          %v1219 = vadd.f32 %v1210, %v1218
          %vm1220 = vcmp.gt.f32.partialorder %v1219, 0.5
          %v1221 = vsel %vm1220, 1, 0
          %v1222 = vcvt.s32.f32 %v1221
          %1223 = vst [vmem:[%s11] sm:$0x3] %v1222
          %v1224 = vld [vmem:[#allocation9] sm:$0x1]
          %1226 = vset.pattern.permute.xlu0 0
          %1227 = vperm.xlu0 %1226, %v1224
          %v1228 = vpop.permute.xlu0 %1227
          %v1230 = vlaneseq
          %v1231 = vshrl.u32 %v1230, 7
          %v1232 = vsub.s32 0, %v1231
          %v1233 = vrot.slane %v1228, %v1232
          %1234 = vst [vmem:[#allocation13] sm:$0x1] %v1233
        $region72: #{_forward_core.2} parent=59 // pred_fallthru
          _
        // Predicated region
        $region73: #{_forward_core.2} parent=59 // pred_check
          %p1235 = pneg %p252
        $region74: #{_forward_core.2} parent=59 // pred_check_branch
          %1237 = sbr.rel (%p1235) target = $region76
        $region75: #{_forward_core.2} parent=59 // pred_region
          %s1239 = ssub.s32 96, 96
          %1240 = vsyncadd [#allocation12], %s1239
          %s1241 = sshll.u32 [#allocation11], 4
          %s1242 = int_to_ptr.vmem [resolvable:$true] %s1241
          %1247 = dma.vmem_to_hbm [thread:$0]  %s1242, 96, %s10, [#allocation12], 32, 32, 2
        $region76: #{_forward_core.2} parent=59 // pred_fallthru
          _
        // Predicated region
        $region77: #{_forward_core.2} parent=59 // pred_check
          %p1248 = pneg %p273
        $region78: #{_forward_core.2} parent=59 // pred_check_branch
          %1250 = sbr.rel (%p1248) target = $region80
        $region79: #{_forward_core.2} parent=59 // pred_region
          _
        $region80: #{_forward_core.2} parent=59 // pred_fallthru
          _
        // Predicated region
        $region81: #{_forward_core.2} parent=59 // pred_check
          %p1251 = pneg %p294
        $region82: #{_forward_core.2} parent=59 // pred_check_branch
          %1253 = sbr.rel (%p1251) target = $region84
        $region83: #{_forward_core.2} parent=59 // pred_region
          %s1255 = ssub.s32 16, 16
          %1256 = vsyncadd [#allocation14], %s1255
          %s1258 = sshll.u32 [#allocation13], 4
          %s1259 = int_to_ptr.vmem [resolvable:$true] %s1258
          %1261 = dma.vmem_to_hbm [thread:$0]  %s1259, 16, %s12, [#allocation14]
        $region84: #{_forward_core.2} parent=59 // pred_fallthru
          _
        // Predicated region
        $region85: #{_forward_core.2} parent=59 // pred_check
          %p1262 = pneg %p315
        $region86: #{_forward_core.2} parent=59 // pred_check_branch
          %1264 = sbr.rel (%p1262) target = $region88
        $region87: #{_forward_core.2} parent=59 // pred_region
          _
        $region88: #{_forward_core.2} parent=59 // pred_fallthru
          _
        // Predicated region
        $region89: #{_forward_core.2} parent=59 // pred_check
          %p1265 = pneg %p252
        $region90: #{_forward_core.2} parent=59 // pred_check_branch
          %1267 = sbr.rel (%p1265) target = $region92
        $region91: #{_forward_core.2} parent=59 // pred_region
          %1268 = dma.done [#allocation12], 96
        $region92: #{_forward_core.2} parent=59 // pred_fallthru
          _
        // Predicated region
        $region93: #{_forward_core.2} parent=59 // pred_check
          %p1269 = pneg %p273
        $region94: #{_forward_core.2} parent=59 // pred_check_branch
          %1271 = sbr.rel (%p1269) target = $region96
        $region95: #{_forward_core.2} parent=59 // pred_region
          _
        $region96: #{_forward_core.2} parent=59 // pred_fallthru
          _
        // Predicated region
        $region97: #{_forward_core.2} parent=59 // pred_check
          %p1272 = pneg %p294
        $region98: #{_forward_core.2} parent=59 // pred_check_branch
          %1274 = sbr.rel (%p1272) target = $region100
        $region99: #{_forward_core.2} parent=59 // pred_region
          %1275 = dma.done [#allocation14], 16
        $region100: #{_forward_core.2} parent=59 // pred_fallthru
          _
        // Predicated region
        $region101: #{_forward_core.2} parent=59 // pred_check
          %p1276 = pneg %p315
        $region102: #{_forward_core.2} parent=59 // pred_check_branch
          %1278 = sbr.rel (%p1276) target = $region104
        $region103: #{_forward_core.2} parent=59 // pred_region
          _
        $region104: #{_forward_core.2} parent=59 // pred_fallthru
          _
      $region60: #{_forward_core.2} parent=5 // pred_fallthru
        _
      %p1279 = scmp.le.s32.totalorder 2, %s24
      // Predicated region
      $region105: #{_forward_core.2} parent=5 // pred_check
        %p1280 = pneg %p1279
      $region106: #{_forward_core.2} parent=5 // pred_check_branch
        %1282 = sbr.rel (%p1280) target = $region108
      $region107: #{_forward_core.2} parent=5 // pred_region
        %s1283 = ssub.s32 %s24, 2
      $region108: #{_forward_core.2} parent=5 // pred_fallthru
        _
    $region6: #{_forward_core.2} parent=1 // loop_footer
      %s28 = sadd.s32 1, %s24
    $region7: #{_forward_core.2} parent=1 // loop_footer_branch
      %23 = sbr.rel target = $region3
    $region8: #{_forward_core.2} parent=1 // loop_exit
      _
    %1284 = vsyncpa [#allocation12], 1
    %s1285 = scalar_lea.sflag [#allocation12], 1
    %1286 = vsyncpa %s1285, 1
    %1287 = vsyncpa [#allocation14], 1

</llo_original>
